<compile_context>
chip_gen: v7x
topology: tpu7x:2x2x1
jax: 0.10.0
libtpu: 0.0.40
codegen_flags: <defaults>
</compile_context>

<pallas_src>
import jax
import jax.numpy as jnp
from jax import lax
from jax.experimental import pallas as pl
from jax.experimental.pallas import tpu as pltpu
import numpy as np


def embedder_kernel(x_ref, w_ih_ref, w_hh_ref, b_ref, w_fc_ref, b_fc_ref,
                    out_ref, xg_ref, hs_ref):
    # x_ref   : (T, A, Nb)   time-major input, batch on lanes
    # w_ih_ref: (4H, A)      weight_ih_l0 (torch layout, no transpose needed)
    # w_hh_ref: (4H, H)      weight_hh_l0
    # b_ref   : (4H, 1)      bias_ih_l0 + bias_hh_l0 (lane-broadcast)
    # w_fc_ref: (E, T*H)     fc.weight
    # b_fc_ref: (E, 1)       fc.bias
    # out_ref : (E, Nb)
    # xg_ref  : (T, 4H, Nb)  VMEM scratch — staged input projection
    # hs_ref  : (T*H, Nb)    VMEM scratch — stacked h_t rows for epilogue fc
    T, A, Nb = x_ref.shape
    G, H = w_hh_ref.shape          # G == 4*H

    # ---- Stage 1 (off the serial chain): input projection + bias for every
    # timestep, staged into VMEM scratch so results don't stay live as traced
    # values across the unrolled recurrence.
    w_ih = w_ih_ref[...]           # (4H, A), hoisted once
    bias = b_ref[...]              # (4H, 1)
    for t in range(T):
        xg_ref[t] = jnp.dot(w_ih, x_ref[t],
                            preferred_element_type=jnp.float32) + bias

    # ---- Stage 2: serial LSTM recurrence, lane-dense gates.
    w_hh_cols = [w_hh_ref[:, j:j + 1] for j in range(H)]     # each (4H, 1)
    h = jnp.zeros((H, Nb), jnp.float32)
    c = jnp.zeros((H, Nb), jnp.float32)

    for t in range(T):             # static unroll: T is compile-time constant
        gates = xg_ref[t]          # (4H, Nb), per-step vld from scratch
        # Recurrent contribution: H VPU broadcast-FMAs (outer products);
        # the true dependency chain never touches the MXU.
        for j in range(H):
            gates = gates + w_hh_cols[j] * h[j:j + 1, :]
        # One sigmoid + one tanh over the whole lane-dense gates vreg.
        sg = jax.nn.sigmoid(gates)
        tg = jnp.tanh(gates)
        i_g = sg[0 * H:1 * H, :]
        f_g = sg[1 * H:2 * H, :]
        g_g = tg[2 * H:3 * H, :]
        o_g = sg[3 * H:4 * H, :]
        c = f_g * c + i_g * g_g
        h = o_g * jnp.tanh(c)
        # Stash h_t rows for the epilogue fc matmul (off the serial chain).
        hs_ref[t * H:(t + 1) * H, :] = h

    # ---- Stage 3 (epilogue): single lane-dense MXU matmul for fc.
    out = jnp.dot(w_fc_ref[...], hs_ref[...],
                  preferred_element_type=jnp.float32) + b_fc_ref[...]
    out_ref[...] = out.astype(out_ref.dtype)


def embedder_forward(x, w_ih, w_hh, b_ih, b_hh, fc_w, fc_b, *, block_n=None):
    """x: (N, T, A) float32, PyTorch batch_first layout. Returns (N, E)."""
    N, T, A = x.shape
    G, H = w_hh.shape              # w_hh: (4H, H)
    E = fc_w.shape[0]              # fc_w: (E, T*H)

    # Batch lives on the 128-lane axis inside the kernel, so block_n must be
    # a multiple of 128 (lane-dense) or the whole batch.  For large batches
    # pick >= 2 blocks (v7x megacore) and cap at 1024 lanes per block; VMEM
    # is never the binding constraint here.
    if block_n is None:
        if N % 256 == 0:
            block_n = min(1024, N // 2)
        elif N % 128 == 0 and N > 128:
            block_n = 128
        else:
            block_n = N
    assert block_n == N or block_n % 128 == 0

    x_tan = jnp.transpose(x, (1, 2, 0)).astype(jnp.float32)   # (T, A, N)
    b = (b_ih + b_hh).reshape(G, 1).astype(jnp.float32)       # (4H, 1)
    b_fc2 = fc_b.reshape(E, 1).astype(jnp.float32)            # (E, 1)

    grid = (pl.cdiv(N, block_n),)

    out_en = pl.pallas_call(
        embedder_kernel,
        out_shape=jax.ShapeDtypeStruct((E, N), jnp.float32),
        grid_spec=pltpu.PrefetchScalarGridSpec(
            num_scalar_prefetch=0,
            grid=grid,
            in_specs=[
                pl.BlockSpec((T, A, block_n), lambda i: (0, 0, i)),
                pl.BlockSpec((G, A), lambda i: (0, 0)),
                pl.BlockSpec((G, H), lambda i: (0, 0)),
                pl.BlockSpec((G, 1), lambda i: (0, 0)),
                pl.BlockSpec((E, T * H), lambda i: (0, 0)),
                pl.BlockSpec((E, 1), lambda i: (0, 0)),
            ],
            out_specs=pl.BlockSpec((E, block_n), lambda i: (0, i)),
            scratch_shapes=[
                pltpu.VMEM((T, G, block_n), jnp.float32),     # staged x-proj
                pltpu.VMEM((T * H, block_n), jnp.float32),    # stacked h_t
            ],
        ),
        compiler_params=pltpu.CompilerParams(
            dimension_semantics=("parallel",),   # v7x: split batch over 2 TCs
        ),
    )(x_tan, w_ih.astype(jnp.float32), w_hh.astype(jnp.float32), b,
      fc_w.astype(jnp.float32), b_fc2)

    return jnp.transpose(out_en)                               # (N, E)


def embedder_reference(x, w_ih, w_hh, b_ih, b_hh, fc_w, fc_b):
    """Pure-JAX reference matching torch.nn.LSTM + Linear semantics."""
    N, T, A = x.shape
    H = w_hh.shape[1]
    b = b_ih + b_hh

    def step(carry, x_t):
        h, c = carry
        gates = x_t @ w_ih.T + h @ w_hh.T + b
        i_g = jax.nn.sigmoid(gates[:, 0 * H:1 * H])
        f_g = jax.nn.sigmoid(gates[:, 1 * H:2 * H])
        g_g = jnp.tanh(gates[:, 2 * H:3 * H])
        o_g = jax.nn.sigmoid(gates[:, 3 * H:4 * H])
        c_new = f_g * c + i_g * g_g
        h_new = o_g * jnp.tanh(c_new)
        return (h_new, c_new), h_new

    (_, _), hs = lax.scan(step, (jnp.zeros((N, H)), jnp.zeros((N, H))),
                          jnp.transpose(x, (1, 0, 2)))
    feat = jnp.transpose(hs, (1, 0, 2)).reshape(N, T * H)
    return feat @ fc_w.T + fc_b


if __name__ == "__main__":
    # Module hyperparameters (small, consistent with the forward pass).
    N = 8              # batch
    alignment = 8      # T (sequence length)
    alphabet_size = 4  # A (LSTM input size)
    embedding_size = 32
    H = 2              # nn.LSTM hidden_size=2 is fixed in the module

    key = jax.random.PRNGKey(0)
    kx, k1, k2, k3, k4, k5, k6 = jax.random.split(key, 7)

    x = jax.random.normal(kx, (N, alignment, alphabet_size), dtype=jnp.float32)

    # Deterministic synthetic parameters (shapes follow torch.nn.LSTM / Linear).
    w_ih = 0.3 * jax.random.normal(k1, (4 * H, alphabet_size), dtype=jnp.float32)
    w_hh = 0.3 * jax.random.normal(k2, (4 * H, H), dtype=jnp.float32)
    b_ih = 0.1 * jax.random.normal(k3, (4 * H,), dtype=jnp.float32)
    b_hh = 0.1 * jax.random.normal(k4, (4 * H,), dtype=jnp.float32)
    fc_w = 0.2 * jax.random.normal(k5, (embedding_size, alignment * H), dtype=jnp.float32)
    fc_b = 0.1 * jax.random.normal(k6, (embedding_size,), dtype=jnp.float32)

    out = embedder_forward(x, w_ih, w_hh, b_ih, b_hh, fc_w, fc_b)
    out = jax.block_until_ready(out)

    ref = embedder_reference(x, w_ih, w_hh, b_ih, b_hh, fc_w, fc_b)
    np.testing.assert_allclose(np.asarray(out), np.asarray(ref), rtol=1e-5, atol=1e-5)

    print("KERNEL_OK")
</pallas_src>

<mosaic_0001>
module attributes {stable_mosaic.version = 11 : i64} {
  func.func @embedder_kernel(%arg0: i32, %arg1: memref<8x4x8xf32, #tpu.memory_space<vmem>>, %arg2: memref<8x4xf32, #tpu.memory_space<vmem>>, %arg3: memref<8x2xf32, #tpu.memory_space<vmem>>, %arg4: memref<8x1xf32, #tpu.memory_space<vmem>>, %arg5: memref<32x16xf32, #tpu.memory_space<vmem>>, %arg6: memref<32x1xf32, #tpu.memory_space<vmem>>, %arg7: memref<32x8xf32, #tpu.memory_space<vmem>>, %arg8: memref<8x8x8xf32, #tpu.memory_space<vmem>>, %arg9: memref<16x8xf32, #tpu.memory_space<vmem>>) attributes {dimension_semantics = [#tpu.dimension_semantics<parallel>], iteration_bounds = array<i64: 1>, scalar_prefetch = 0 : i64, scratch_operands = 2 : i64, tpu.core_type = #tpu.core_type<tc>, window_params = [{transform_indices = @transform_0, window_bounds = array<i64: 8, 4, 8>}, {pipeline_mode = #tpu.pipeline_mode<synchronous>, transform_indices = @transform_1, window_bounds = array<i64: 8, 4>}, {pipeline_mode = #tpu.pipeline_mode<synchronous>, transform_indices = @transform_2, window_bounds = array<i64: 8, 2>}, {pipeline_mode = #tpu.pipeline_mode<synchronous>, transform_indices = @transform_3, window_bounds = array<i64: 8, 1>}, {pipeline_mode = #tpu.pipeline_mode<synchronous>, transform_indices = @transform_4, window_bounds = array<i64: 32, 16>}, {pipeline_mode = #tpu.pipeline_mode<synchronous>, transform_indices = @transform_5, window_bounds = array<i64: 32, 1>}, {transform_indices = @transform_6, window_bounds = array<i64: 32, 8>}]} {
    %c0 = arith.constant 0 : index
    %c0_0 = arith.constant 0 : index
    %0 = vector.load %arg2[%c0, %c0_0] : memref<8x4xf32, #tpu.memory_space<vmem>>, vector<8x4xf32>
    %c0_1 = arith.constant 0 : index
    %c0_2 = arith.constant 0 : index
    %1 = vector.load %arg4[%c0_1, %c0_2] : memref<8x1xf32, #tpu.memory_space<vmem>>, vector<8x1xf32>
    %c0_3 = arith.constant 0 : index
    %c0_4 = arith.constant 0 : index
    %c0_5 = arith.constant 0 : index
    %2 = vector.load %arg1[%c0_3, %c0_4, %c0_5] : memref<8x4x8xf32, #tpu.memory_space<vmem>>, vector<1x4x8xf32>
    %3 = vector.shape_cast %2 : vector<1x4x8xf32> to vector<4x8xf32>
    %cst = arith.constant dense<0.000000e+00> : vector<8x8xf32>
    %4 = tpu.matmul %0, %3, %cst {dimension_numbers = #tpu.dot_dimension_numbers<[1], [0], [0], [1], [0, 0, 1, 1], [], []>} : vector<8x4xf32>, vector<4x8xf32>, vector<8x8xf32> -> vector<8x8xf32>
    %5 = vector.broadcast %1 : vector<8x1xf32> to vector<8x8xf32>
    %6 = arith.addf %4, %5 : vector<8x8xf32>
    %c0_6 = arith.constant 0 : index
    %c0_7 = arith.constant 0 : index
    %c0_8 = arith.constant 0 : index
    %7 = vector.load %arg8[%c0_6, %c0_7, %c0_8] : memref<8x8x8xf32, #tpu.memory_space<vmem>>, vector<1x8x8xf32>
    %8 = vector.shape_cast %7 : vector<1x8x8xf32> to vector<8x8xf32>
    %9 = vector.shape_cast %6 : vector<8x8xf32> to vector<1x8x8xf32>
    tpu.vector_store %arg8[%c0_6, %c0_7, %c0_8], %9 {strides = array<i32>} : memref<8x8x8xf32, #tpu.memory_space<vmem>>, vector<1x8x8xf32>,
    %c1 = arith.constant 1 : index
    %c0_9 = arith.constant 0 : index
    %c0_10 = arith.constant 0 : index
    %10 = vector.load %arg1[%c1, %c0_9, %c0_10] : memref<8x4x8xf32, #tpu.memory_space<vmem>>, vector<1x4x8xf32>
    %11 = vector.shape_cast %10 : vector<1x4x8xf32> to vector<4x8xf32>
    %cst_11 = arith.constant dense<0.000000e+00> : vector<8x8xf32>
    %12 = tpu.matmul %0, %11, %cst_11 {dimension_numbers = #tpu.dot_dimension_numbers<[1], [0], [0], [1], [0, 0, 1, 1], [], []>} : vector<8x4xf32>, vector<4x8xf32>, vector<8x8xf32> -> vector<8x8xf32>
    %13 = vector.broadcast %1 : vector<8x1xf32> to vector<8x8xf32>
    %14 = arith.addf %12, %13 : vector<8x8xf32>
    %c1_12 = arith.constant 1 : index
    %c0_13 = arith.constant 0 : index
    %c0_14 = arith.constant 0 : index
    %15 = vector.load %arg8[%c1_12, %c0_13, %c0_14] : memref<8x8x8xf32, #tpu.memory_space<vmem>>, vector<1x8x8xf32>
    %16 = vector.shape_cast %15 : vector<1x8x8xf32> to vector<8x8xf32>
    %17 = vector.shape_cast %14 : vector<8x8xf32> to vector<1x8x8xf32>
    tpu.vector_store %arg8[%c1_12, %c0_13, %c0_14], %17 {strides = array<i32>} : memref<8x8x8xf32, #tpu.memory_space<vmem>>, vector<1x8x8xf32>,
    %c2 = arith.constant 2 : index
    %c0_15 = arith.constant 0 : index
    %c0_16 = arith.constant 0 : index
    %18 = vector.load %arg1[%c2, %c0_15, %c0_16] : memref<8x4x8xf32, #tpu.memory_space<vmem>>, vector<1x4x8xf32>
    %19 = vector.shape_cast %18 : vector<1x4x8xf32> to vector<4x8xf32>
    %cst_17 = arith.constant dense<0.000000e+00> : vector<8x8xf32>
    %20 = tpu.matmul %0, %19, %cst_17 {dimension_numbers = #tpu.dot_dimension_numbers<[1], [0], [0], [1], [0, 0, 1, 1], [], []>} : vector<8x4xf32>, vector<4x8xf32>, vector<8x8xf32> -> vector<8x8xf32>
    %21 = vector.broadcast %1 : vector<8x1xf32> to vector<8x8xf32>
    %22 = arith.addf %20, %21 : vector<8x8xf32>
    %c2_18 = arith.constant 2 : index
    %c0_19 = arith.constant 0 : index
    %c0_20 = arith.constant 0 : index
    %23 = vector.load %arg8[%c2_18, %c0_19, %c0_20] : memref<8x8x8xf32, #tpu.memory_space<vmem>>, vector<1x8x8xf32>
    %24 = vector.shape_cast %23 : vector<1x8x8xf32> to vector<8x8xf32>
    %25 = vector.shape_cast %22 : vector<8x8xf32> to vector<1x8x8xf32>
    tpu.vector_store %arg8[%c2_18, %c0_19, %c0_20], %25 {strides = array<i32>} : memref<8x8x8xf32, #tpu.memory_space<vmem>>, vector<1x8x8xf32>,
    %c3 = arith.constant 3 : index
    %c0_21 = arith.constant 0 : index
    %c0_22 = arith.constant 0 : index
    %26 = vector.load %arg1[%c3, %c0_21, %c0_22] : memref<8x4x8xf32, #tpu.memory_space<vmem>>, vector<1x4x8xf32>
    %27 = vector.shape_cast %26 : vector<1x4x8xf32> to vector<4x8xf32>
    %cst_23 = arith.constant dense<0.000000e+00> : vector<8x8xf32>
    %28 = tpu.matmul %0, %27, %cst_23 {dimension_numbers = #tpu.dot_dimension_numbers<[1], [0], [0], [1], [0, 0, 1, 1], [], []>} : vector<8x4xf32>, vector<4x8xf32>, vector<8x8xf32> -> vector<8x8xf32>
    %29 = vector.broadcast %1 : vector<8x1xf32> to vector<8x8xf32>
    %30 = arith.addf %28, %29 : vector<8x8xf32>
    %c3_24 = arith.constant 3 : index
    %c0_25 = arith.constant 0 : index
    %c0_26 = arith.constant 0 : index
    %31 = vector.load %arg8[%c3_24, %c0_25, %c0_26] : memref<8x8x8xf32, #tpu.memory_space<vmem>>, vector<1x8x8xf32>
    %32 = vector.shape_cast %31 : vector<1x8x8xf32> to vector<8x8xf32>
    %33 = vector.shape_cast %30 : vector<8x8xf32> to vector<1x8x8xf32>
    tpu.vector_store %arg8[%c3_24, %c0_25, %c0_26], %33 {strides = array<i32>} : memref<8x8x8xf32, #tpu.memory_space<vmem>>, vector<1x8x8xf32>,
    %c4 = arith.constant 4 : index
    %c0_27 = arith.constant 0 : index
    %c0_28 = arith.constant 0 : index
    %34 = vector.load %arg1[%c4, %c0_27, %c0_28] : memref<8x4x8xf32, #tpu.memory_space<vmem>>, vector<1x4x8xf32>
    %35 = vector.shape_cast %34 : vector<1x4x8xf32> to vector<4x8xf32>
    %cst_29 = arith.constant dense<0.000000e+00> : vector<8x8xf32>
    %36 = tpu.matmul %0, %35, %cst_29 {dimension_numbers = #tpu.dot_dimension_numbers<[1], [0], [0], [1], [0, 0, 1, 1], [], []>} : vector<8x4xf32>, vector<4x8xf32>, vector<8x8xf32> -> vector<8x8xf32>
    %37 = vector.broadcast %1 : vector<8x1xf32> to vector<8x8xf32>
    %38 = arith.addf %36, %37 : vector<8x8xf32>
    %c4_30 = arith.constant 4 : index
    %c0_31 = arith.constant 0 : index
    %c0_32 = arith.constant 0 : index
    %39 = vector.load %arg8[%c4_30, %c0_31, %c0_32] : memref<8x8x8xf32, #tpu.memory_space<vmem>>, vector<1x8x8xf32>
    %40 = vector.shape_cast %39 : vector<1x8x8xf32> to vector<8x8xf32>
    %41 = vector.shape_cast %38 : vector<8x8xf32> to vector<1x8x8xf32>
    tpu.vector_store %arg8[%c4_30, %c0_31, %c0_32], %41 {strides = array<i32>} : memref<8x8x8xf32, #tpu.memory_space<vmem>>, vector<1x8x8xf32>,
    %c5 = arith.constant 5 : index
    %c0_33 = arith.constant 0 : index
    %c0_34 = arith.constant 0 : index
    %42 = vector.load %arg1[%c5, %c0_33, %c0_34] : memref<8x4x8xf32, #tpu.memory_space<vmem>>, vector<1x4x8xf32>
    %43 = vector.shape_cast %42 : vector<1x4x8xf32> to vector<4x8xf32>
    %cst_35 = arith.constant dense<0.000000e+00> : vector<8x8xf32>
    %44 = tpu.matmul %0, %43, %cst_35 {dimension_numbers = #tpu.dot_dimension_numbers<[1], [0], [0], [1], [0, 0, 1, 1], [], []>} : vector<8x4xf32>, vector<4x8xf32>, vector<8x8xf32> -> vector<8x8xf32>
    %45 = vector.broadcast %1 : vector<8x1xf32> to vector<8x8xf32>
    %46 = arith.addf %44, %45 : vector<8x8xf32>
    %c5_36 = arith.constant 5 : index
    %c0_37 = arith.constant 0 : index
    %c0_38 = arith.constant 0 : index
    %47 = vector.load %arg8[%c5_36, %c0_37, %c0_38] : memref<8x8x8xf32, #tpu.memory_space<vmem>>, vector<1x8x8xf32>
    %48 = vector.shape_cast %47 : vector<1x8x8xf32> to vector<8x8xf32>
    %49 = vector.shape_cast %46 : vector<8x8xf32> to vector<1x8x8xf32>
    tpu.vector_store %arg8[%c5_36, %c0_37, %c0_38], %49 {strides = array<i32>} : memref<8x8x8xf32, #tpu.memory_space<vmem>>, vector<1x8x8xf32>,
    %c6 = arith.constant 6 : index
    %c0_39 = arith.constant 0 : index
    %c0_40 = arith.constant 0 : index
    %50 = vector.load %arg1[%c6, %c0_39, %c0_40] : memref<8x4x8xf32, #tpu.memory_space<vmem>>, vector<1x4x8xf32>
    %51 = vector.shape_cast %50 : vector<1x4x8xf32> to vector<4x8xf32>
    %cst_41 = arith.constant dense<0.000000e+00> : vector<8x8xf32>
    %52 = tpu.matmul %0, %51, %cst_41 {dimension_numbers = #tpu.dot_dimension_numbers<[1], [0], [0], [1], [0, 0, 1, 1], [], []>} : vector<8x4xf32>, vector<4x8xf32>, vector<8x8xf32> -> vector<8x8xf32>
    %53 = vector.broadcast %1 : vector<8x1xf32> to vector<8x8xf32>
    %54 = arith.addf %52, %53 : vector<8x8xf32>
    %c6_42 = arith.constant 6 : index
    %c0_43 = arith.constant 0 : index
    %c0_44 = arith.constant 0 : index
    %55 = vector.load %arg8[%c6_42, %c0_43, %c0_44] : memref<8x8x8xf32, #tpu.memory_space<vmem>>, vector<1x8x8xf32>
    %56 = vector.shape_cast %55 : vector<1x8x8xf32> to vector<8x8xf32>
    %57 = vector.shape_cast %54 : vector<8x8xf32> to vector<1x8x8xf32>
    tpu.vector_store %arg8[%c6_42, %c0_43, %c0_44], %57 {strides = array<i32>} : memref<8x8x8xf32, #tpu.memory_space<vmem>>, vector<1x8x8xf32>,
    %c7 = arith.constant 7 : index
    %c0_45 = arith.constant 0 : index
    %c0_46 = arith.constant 0 : index
    %58 = vector.load %arg1[%c7, %c0_45, %c0_46] : memref<8x4x8xf32, #tpu.memory_space<vmem>>, vector<1x4x8xf32>
    %59 = vector.shape_cast %58 : vector<1x4x8xf32> to vector<4x8xf32>
    %cst_47 = arith.constant dense<0.000000e+00> : vector<8x8xf32>
    %60 = tpu.matmul %0, %59, %cst_47 {dimension_numbers = #tpu.dot_dimension_numbers<[1], [0], [0], [1], [0, 0, 1, 1], [], []>} : vector<8x4xf32>, vector<4x8xf32>, vector<8x8xf32> -> vector<8x8xf32>
    %61 = vector.broadcast %1 : vector<8x1xf32> to vector<8x8xf32>
    %62 = arith.addf %60, %61 : vector<8x8xf32>
    %c7_48 = arith.constant 7 : index
    %c0_49 = arith.constant 0 : index
    %c0_50 = arith.constant 0 : index
    %63 = vector.load %arg8[%c7_48, %c0_49, %c0_50] : memref<8x8x8xf32, #tpu.memory_space<vmem>>, vector<1x8x8xf32>
    %64 = vector.shape_cast %63 : vector<1x8x8xf32> to vector<8x8xf32>
    %65 = vector.shape_cast %62 : vector<8x8xf32> to vector<1x8x8xf32>
    tpu.vector_store %arg8[%c7_48, %c0_49, %c0_50], %65 {strides = array<i32>} : memref<8x8x8xf32, #tpu.memory_space<vmem>>, vector<1x8x8xf32>,
    %c0_51 = arith.constant 0 : index
    %c0_52 = arith.constant 0 : index
    %66 = vector.load %arg3[%c0_51, %c0_52] : memref<8x2xf32, #tpu.memory_space<vmem>>, vector<8x1xf32>
    %c0_53 = arith.constant 0 : index
    %c1_54 = arith.constant 1 : index
    %67 = vector.load %arg3[%c0_53, %c1_54] : memref<8x2xf32, #tpu.memory_space<vmem>>, vector<8x1xf32>
    %cst_55 = arith.constant 0.000000e+00 : f32
    %68 = vector.broadcast %cst_55 : f32 to vector<2x8xf32>
    %cst_56 = arith.constant 0.000000e+00 : f32
    %69 = vector.broadcast %cst_56 : f32 to vector<2x8xf32>
    %c0_57 = arith.constant 0 : index
    %c0_58 = arith.constant 0 : index
    %c0_59 = arith.constant 0 : index
    %70 = vector.load %arg8[%c0_57, %c0_58, %c0_59] : memref<8x8x8xf32, #tpu.memory_space<vmem>>, vector<1x8x8xf32>
    %71 = vector.shape_cast %70 : vector<1x8x8xf32> to vector<8x8xf32>
    %72 = vector.extract_strided_slice %68 {offsets = [0, 0], sizes = [1, 8], strides = [1, 1]} : vector<2x8xf32> to vector<1x8xf32>
    %73 = vector.broadcast %66 : vector<8x1xf32> to vector<8x8xf32>
    %74 = vector.broadcast %72 : vector<1x8xf32> to vector<8x8xf32>
    %75 = arith.mulf %73, %74 : vector<8x8xf32>
    %76 = arith.addf %71, %75 : vector<8x8xf32>
    %77 = vector.extract_strided_slice %68 {offsets = [1, 0], sizes = [1, 8], strides = [1, 1]} : vector<2x8xf32> to vector<1x8xf32>
    %78 = vector.broadcast %67 : vector<8x1xf32> to vector<8x8xf32>
    %79 = vector.broadcast %77 : vector<1x8xf32> to vector<8x8xf32>
    %80 = arith.mulf %78, %79 : vector<8x8xf32>
    %81 = arith.addf %76, %80 : vector<8x8xf32>
    %82 = arith.negf %81 : vector<8x8xf32>
    %83 = math.exp %82 : vector<8x8xf32>
    %cst_60 = arith.constant 1.000000e+00 : f32
    %84 = vector.broadcast %cst_60 : f32 to vector<8x8xf32>
    %85 = arith.addf %84, %83 : vector<8x8xf32>
    %86 = arith.divf %84, %85 : vector<8x8xf32>
    %87 = math.tanh %81 : vector<8x8xf32>
    %88 = vector.extract_strided_slice %86 {offsets = [0, 0], sizes = [2, 8], strides = [1, 1]} : vector<8x8xf32> to vector<2x8xf32>
    %89 = vector.extract_strided_slice %86 {offsets = [2, 0], sizes = [2, 8], strides = [1, 1]} : vector<8x8xf32> to vector<2x8xf32>
    %90 = vector.extract_strided_slice %87 {offsets = [4, 0], sizes = [2, 8], strides = [1, 1]} : vector<8x8xf32> to vector<2x8xf32>
    %91 = vector.extract_strided_slice %86 {offsets = [6, 0], sizes = [2, 8], strides = [1, 1]} : vector<8x8xf32> to vector<2x8xf32>
    %92 = arith.mulf %89, %69 : vector<2x8xf32>
    %93 = arith.mulf %88, %90 : vector<2x8xf32>
    %94 = arith.addf %92, %93 : vector<2x8xf32>
    %95 = math.tanh %94 : vector<2x8xf32>
    %96 = arith.mulf %91, %95 : vector<2x8xf32>
    %c0_61 = arith.constant 0 : index
    %c0_62 = arith.constant 0 : index
    %97 = vector.load %arg9[%c0_61, %c0_62] : memref<16x8xf32, #tpu.memory_space<vmem>>, vector<2x8xf32>
    tpu.vector_store %arg9[%c0_61, %c0_62], %96 {strides = array<i32>} : memref<16x8xf32, #tpu.memory_space<vmem>>, vector<2x8xf32>,
    %c1_63 = arith.constant 1 : index
    %c0_64 = arith.constant 0 : index
    %c0_65 = arith.constant 0 : index
    %98 = vector.load %arg8[%c1_63, %c0_64, %c0_65] : memref<8x8x8xf32, #tpu.memory_space<vmem>>, vector<1x8x8xf32>
    %99 = vector.shape_cast %98 : vector<1x8x8xf32> to vector<8x8xf32>
    %100 = vector.extract_strided_slice %96 {offsets = [0, 0], sizes = [1, 8], strides = [1, 1]} : vector<2x8xf32> to vector<1x8xf32>
    %101 = vector.broadcast %66 : vector<8x1xf32> to vector<8x8xf32>
    %102 = vector.broadcast %100 : vector<1x8xf32> to vector<8x8xf32>
    %103 = arith.mulf %101, %102 : vector<8x8xf32>
    %104 = arith.addf %99, %103 : vector<8x8xf32>
    %105 = vector.extract_strided_slice %96 {offsets = [1, 0], sizes = [1, 8], strides = [1, 1]} : vector<2x8xf32> to vector<1x8xf32>
    %106 = vector.broadcast %67 : vector<8x1xf32> to vector<8x8xf32>
    %107 = vector.broadcast %105 : vector<1x8xf32> to vector<8x8xf32>
    %108 = arith.mulf %106, %107 : vector<8x8xf32>
    %109 = arith.addf %104, %108 : vector<8x8xf32>
    %110 = arith.negf %109 : vector<8x8xf32>
    %111 = math.exp %110 : vector<8x8xf32>
    %cst_66 = arith.constant 1.000000e+00 : f32
    %112 = vector.broadcast %cst_66 : f32 to vector<8x8xf32>
    %113 = arith.addf %112, %111 : vector<8x8xf32>
    %114 = arith.divf %112, %113 : vector<8x8xf32>
    %115 = math.tanh %109 : vector<8x8xf32>
    %116 = vector.extract_strided_slice %114 {offsets = [0, 0], sizes = [2, 8], strides = [1, 1]} : vector<8x8xf32> to vector<2x8xf32>
    %117 = vector.extract_strided_slice %114 {offsets = [2, 0], sizes = [2, 8], strides = [1, 1]} : vector<8x8xf32> to vector<2x8xf32>
    %118 = vector.extract_strided_slice %115 {offsets = [4, 0], sizes = [2, 8], strides = [1, 1]} : vector<8x8xf32> to vector<2x8xf32>
    %119 = vector.extract_strided_slice %114 {offsets = [6, 0], sizes = [2, 8], strides = [1, 1]} : vector<8x8xf32> to vector<2x8xf32>
    %120 = arith.mulf %117, %94 : vector<2x8xf32>
    %121 = arith.mulf %116, %118 : vector<2x8xf32>
    %122 = arith.addf %120, %121 : vector<2x8xf32>
    %123 = math.tanh %122 : vector<2x8xf32>
    %124 = arith.mulf %119, %123 : vector<2x8xf32>
    %c2_67 = arith.constant 2 : index
    %c0_68 = arith.constant 0 : index
    %125 = vector.load %arg9[%c2_67, %c0_68] : memref<16x8xf32, #tpu.memory_space<vmem>>, vector<2x8xf32>
    tpu.vector_store %arg9[%c2_67, %c0_68], %124 {strides = array<i32>} : memref<16x8xf32, #tpu.memory_space<vmem>>, vector<2x8xf32>,
    %c2_69 = arith.constant 2 : index
    %c0_70 = arith.constant 0 : index
    %c0_71 = arith.constant 0 : index
    %126 = vector.load %arg8[%c2_69, %c0_70, %c0_71] : memref<8x8x8xf32, #tpu.memory_space<vmem>>, vector<1x8x8xf32>
    %127 = vector.shape_cast %126 : vector<1x8x8xf32> to vector<8x8xf32>
    %128 = vector.extract_strided_slice %124 {offsets = [0, 0], sizes = [1, 8], strides = [1, 1]} : vector<2x8xf32> to vector<1x8xf32>
    %129 = vector.broadcast %66 : vector<8x1xf32> to vector<8x8xf32>
    %130 = vector.broadcast %128 : vector<1x8xf32> to vector<8x8xf32>
    %131 = arith.mulf %129, %130 : vector<8x8xf32>
    %132 = arith.addf %127, %131 : vector<8x8xf32>
    %133 = vector.extract_strided_slice %124 {offsets = [1, 0], sizes = [1, 8], strides = [1, 1]} : vector<2x8xf32> to vector<1x8xf32>
    %134 = vector.broadcast %67 : vector<8x1xf32> to vector<8x8xf32>
    %135 = vector.broadcast %133 : vector<1x8xf32> to vector<8x8xf32>
    %136 = arith.mulf %134, %135 : vector<8x8xf32>
    %137 = arith.addf %132, %136 : vector<8x8xf32>
    %138 = arith.negf %137 : vector<8x8xf32>
    %139 = math.exp %138 : vector<8x8xf32>
    %cst_72 = arith.constant 1.000000e+00 : f32
    %140 = vector.broadcast %cst_72 : f32 to vector<8x8xf32>
    %141 = arith.addf %140, %139 : vector<8x8xf32>
    %142 = arith.divf %140, %141 : vector<8x8xf32>
    %143 = math.tanh %137 : vector<8x8xf32>
    %144 = vector.extract_strided_slice %142 {offsets = [0, 0], sizes = [2, 8], strides = [1, 1]} : vector<8x8xf32> to vector<2x8xf32>
    %145 = vector.extract_strided_slice %142 {offsets = [2, 0], sizes = [2, 8], strides = [1, 1]} : vector<8x8xf32> to vector<2x8xf32>
    %146 = vector.extract_strided_slice %143 {offsets = [4, 0], sizes = [2, 8], strides = [1, 1]} : vector<8x8xf32> to vector<2x8xf32>
    %147 = vector.extract_strided_slice %142 {offsets = [6, 0], sizes = [2, 8], strides = [1, 1]} : vector<8x8xf32> to vector<2x8xf32>
    %148 = arith.mulf %145, %122 : vector<2x8xf32>
    %149 = arith.mulf %144, %146 : vector<2x8xf32>
    %150 = arith.addf %148, %149 : vector<2x8xf32>
    %151 = math.tanh %150 : vector<2x8xf32>
    %152 = arith.mulf %147, %151 : vector<2x8xf32>
    %c4_73 = arith.constant 4 : index
    %c0_74 = arith.constant 0 : index
    %153 = vector.load %arg9[%c4_73, %c0_74] : memref<16x8xf32, #tpu.memory_space<vmem>>, vector<2x8xf32>
    tpu.vector_store %arg9[%c4_73, %c0_74], %152 {strides = array<i32>} : memref<16x8xf32, #tpu.memory_space<vmem>>, vector<2x8xf32>,
    %c3_75 = arith.constant 3 : index
    %c0_76 = arith.constant 0 : index
    %c0_77 = arith.constant 0 : index
    %154 = vector.load %arg8[%c3_75, %c0_76, %c0_77] : memref<8x8x8xf32, #tpu.memory_space<vmem>>, vector<1x8x8xf32>
    %155 = vector.shape_cast %154 : vector<1x8x8xf32> to vector<8x8xf32>
    %156 = vector.extract_strided_slice %152 {offsets = [0, 0], sizes = [1, 8], strides = [1, 1]} : vector<2x8xf32> to vector<1x8xf32>
    %157 = vector.broadcast %66 : vector<8x1xf32> to vector<8x8xf32>
    %158 = vector.broadcast %156 : vector<1x8xf32> to vector<8x8xf32>
    %159 = arith.mulf %157, %158 : vector<8x8xf32>
    %160 = arith.addf %155, %159 : vector<8x8xf32>
    %161 = vector.extract_strided_slice %152 {offsets = [1, 0], sizes = [1, 8], strides = [1, 1]} : vector<2x8xf32> to vector<1x8xf32>
    %162 = vector.broadcast %67 : vector<8x1xf32> to vector<8x8xf32>
    %163 = vector.broadcast %161 : vector<1x8xf32> to vector<8x8xf32>
    %164 = arith.mulf %162, %163 : vector<8x8xf32>
    %165 = arith.addf %160, %164 : vector<8x8xf32>
    %166 = arith.negf %165 : vector<8x8xf32>
    %167 = math.exp %166 : vector<8x8xf32>
    %cst_78 = arith.constant 1.000000e+00 : f32
    %168 = vector.broadcast %cst_78 : f32 to vector<8x8xf32>
    %169 = arith.addf %168, %167 : vector<8x8xf32>
    %170 = arith.divf %168, %169 : vector<8x8xf32>
    %171 = math.tanh %165 : vector<8x8xf32>
    %172 = vector.extract_strided_slice %170 {offsets = [0, 0], sizes = [2, 8], strides = [1, 1]} : vector<8x8xf32> to vector<2x8xf32>
    %173 = vector.extract_strided_slice %170 {offsets = [2, 0], sizes = [2, 8], strides = [1, 1]} : vector<8x8xf32> to vector<2x8xf32>
    %174 = vector.extract_strided_slice %171 {offsets = [4, 0], sizes = [2, 8], strides = [1, 1]} : vector<8x8xf32> to vector<2x8xf32>
    %175 = vector.extract_strided_slice %170 {offsets = [6, 0], sizes = [2, 8], strides = [1, 1]} : vector<8x8xf32> to vector<2x8xf32>
    %176 = arith.mulf %173, %150 : vector<2x8xf32>
    %177 = arith.mulf %172, %174 : vector<2x8xf32>
    %178 = arith.addf %176, %177 : vector<2x8xf32>
    %179 = math.tanh %178 : vector<2x8xf32>
    %180 = arith.mulf %175, %179 : vector<2x8xf32>
    %c6_79 = arith.constant 6 : index
    %c0_80 = arith.constant 0 : index
    %181 = vector.load %arg9[%c6_79, %c0_80] : memref<16x8xf32, #tpu.memory_space<vmem>>, vector<2x8xf32>
    tpu.vector_store %arg9[%c6_79, %c0_80], %180 {strides = array<i32>} : memref<16x8xf32, #tpu.memory_space<vmem>>, vector<2x8xf32>,
    %c4_81 = arith.constant 4 : index
    %c0_82 = arith.constant 0 : index
    %c0_83 = arith.constant 0 : index
    %182 = vector.load %arg8[%c4_81, %c0_82, %c0_83] : memref<8x8x8xf32, #tpu.memory_space<vmem>>, vector<1x8x8xf32>
    %183 = vector.shape_cast %182 : vector<1x8x8xf32> to vector<8x8xf32>
    %184 = vector.extract_strided_slice %180 {offsets = [0, 0], sizes = [1, 8], strides = [1, 1]} : vector<2x8xf32> to vector<1x8xf32>
    %185 = vector.broadcast %66 : vector<8x1xf32> to vector<8x8xf32>
    %186 = vector.broadcast %184 : vector<1x8xf32> to vector<8x8xf32>
    %187 = arith.mulf %185, %186 : vector<8x8xf32>
    %188 = arith.addf %183, %187 : vector<8x8xf32>
    %189 = vector.extract_strided_slice %180 {offsets = [1, 0], sizes = [1, 8], strides = [1, 1]} : vector<2x8xf32> to vector<1x8xf32>
    %190 = vector.broadcast %67 : vector<8x1xf32> to vector<8x8xf32>
    %191 = vector.broadcast %189 : vector<1x8xf32> to vector<8x8xf32>
    %192 = arith.mulf %190, %191 : vector<8x8xf32>
    %193 = arith.addf %188, %192 : vector<8x8xf32>
    %194 = arith.negf %193 : vector<8x8xf32>
    %195 = math.exp %194 : vector<8x8xf32>
    %cst_84 = arith.constant 1.000000e+00 : f32
    %196 = vector.broadcast %cst_84 : f32 to vector<8x8xf32>
    %197 = arith.addf %196, %195 : vector<8x8xf32>
    %198 = arith.divf %196, %197 : vector<8x8xf32>
    %199 = math.tanh %193 : vector<8x8xf32>
    %200 = vector.extract_strided_slice %198 {offsets = [0, 0], sizes = [2, 8], strides = [1, 1]} : vector<8x8xf32> to vector<2x8xf32>
    %201 = vector.extract_strided_slice %198 {offsets = [2, 0], sizes = [2, 8], strides = [1, 1]} : vector<8x8xf32> to vector<2x8xf32>
    %202 = vector.extract_strided_slice %199 {offsets = [4, 0], sizes = [2, 8], strides = [1, 1]} : vector<8x8xf32> to vector<2x8xf32>
    %203 = vector.extract_strided_slice %198 {offsets = [6, 0], sizes = [2, 8], strides = [1, 1]} : vector<8x8xf32> to vector<2x8xf32>
    %204 = arith.mulf %201, %178 : vector<2x8xf32>
    %205 = arith.mulf %200, %202 : vector<2x8xf32>
    %206 = arith.addf %204, %205 : vector<2x8xf32>
    %207 = math.tanh %206 : vector<2x8xf32>
    %208 = arith.mulf %203, %207 : vector<2x8xf32>
    %c8 = arith.constant 8 : index
    %c0_85 = arith.constant 0 : index
    %209 = vector.load %arg9[%c8, %c0_85] : memref<16x8xf32, #tpu.memory_space<vmem>>, vector<2x8xf32>
    tpu.vector_store %arg9[%c8, %c0_85], %208 {strides = array<i32>} : memref<16x8xf32, #tpu.memory_space<vmem>>, vector<2x8xf32>,
    %c5_86 = arith.constant 5 : index
    %c0_87 = arith.constant 0 : index
    %c0_88 = arith.constant 0 : index
    %210 = vector.load %arg8[%c5_86, %c0_87, %c0_88] : memref<8x8x8xf32, #tpu.memory_space<vmem>>, vector<1x8x8xf32>
    %211 = vector.shape_cast %210 : vector<1x8x8xf32> to vector<8x8xf32>
    %212 = vector.extract_strided_slice %208 {offsets = [0, 0], sizes = [1, 8], strides = [1, 1]} : vector<2x8xf32> to vector<1x8xf32>
    %213 = vector.broadcast %66 : vector<8x1xf32> to vector<8x8xf32>
    %214 = vector.broadcast %212 : vector<1x8xf32> to vector<8x8xf32>
    %215 = arith.mulf %213, %214 : vector<8x8xf32>
    %216 = arith.addf %211, %215 : vector<8x8xf32>
    %217 = vector.extract_strided_slice %208 {offsets = [1, 0], sizes = [1, 8], strides = [1, 1]} : vector<2x8xf32> to vector<1x8xf32>
    %218 = vector.broadcast %67 : vector<8x1xf32> to vector<8x8xf32>
    %219 = vector.broadcast %217 : vector<1x8xf32> to vector<8x8xf32>
    %220 = arith.mulf %218, %219 : vector<8x8xf32>
    %221 = arith.addf %216, %220 : vector<8x8xf32>
    %222 = arith.negf %221 : vector<8x8xf32>
    %223 = math.exp %222 : vector<8x8xf32>
    %cst_89 = arith.constant 1.000000e+00 : f32
    %224 = vector.broadcast %cst_89 : f32 to vector<8x8xf32>
    %225 = arith.addf %224, %223 : vector<8x8xf32>
    %226 = arith.divf %224, %225 : vector<8x8xf32>
    %227 = math.tanh %221 : vector<8x8xf32>
    %228 = vector.extract_strided_slice %226 {offsets = [0, 0], sizes = [2, 8], strides = [1, 1]} : vector<8x8xf32> to vector<2x8xf32>
    %229 = vector.extract_strided_slice %226 {offsets = [2, 0], sizes = [2, 8], strides = [1, 1]} : vector<8x8xf32> to vector<2x8xf32>
    %230 = vector.extract_strided_slice %227 {offsets = [4, 0], sizes = [2, 8], strides = [1, 1]} : vector<8x8xf32> to vector<2x8xf32>
    %231 = vector.extract_strided_slice %226 {offsets = [6, 0], sizes = [2, 8], strides = [1, 1]} : vector<8x8xf32> to vector<2x8xf32>
    %232 = arith.mulf %229, %206 : vector<2x8xf32>
    %233 = arith.mulf %228, %230 : vector<2x8xf32>
    %234 = arith.addf %232, %233 : vector<2x8xf32>
    %235 = math.tanh %234 : vector<2x8xf32>
    %236 = arith.mulf %231, %235 : vector<2x8xf32>
    %c10 = arith.constant 10 : index
    %c0_90 = arith.constant 0 : index
    %237 = vector.load %arg9[%c10, %c0_90] : memref<16x8xf32, #tpu.memory_space<vmem>>, vector<2x8xf32>
    tpu.vector_store %arg9[%c10, %c0_90], %236 {strides = array<i32>} : memref<16x8xf32, #tpu.memory_space<vmem>>, vector<2x8xf32>,
    %c6_91 = arith.constant 6 : index
    %c0_92 = arith.constant 0 : index
    %c0_93 = arith.constant 0 : index
    %238 = vector.load %arg8[%c6_91, %c0_92, %c0_93] : memref<8x8x8xf32, #tpu.memory_space<vmem>>, vector<1x8x8xf32>
    %239 = vector.shape_cast %238 : vector<1x8x8xf32> to vector<8x8xf32>
    %240 = vector.extract_strided_slice %236 {offsets = [0, 0], sizes = [1, 8], strides = [1, 1]} : vector<2x8xf32> to vector<1x8xf32>
    %241 = vector.broadcast %66 : vector<8x1xf32> to vector<8x8xf32>
    %242 = vector.broadcast %240 : vector<1x8xf32> to vector<8x8xf32>
    %243 = arith.mulf %241, %242 : vector<8x8xf32>
    %244 = arith.addf %239, %243 : vector<8x8xf32>
    %245 = vector.extract_strided_slice %236 {offsets = [1, 0], sizes = [1, 8], strides = [1, 1]} : vector<2x8xf32> to vector<1x8xf32>
    %246 = vector.broadcast %67 : vector<8x1xf32> to vector<8x8xf32>
    %247 = vector.broadcast %245 : vector<1x8xf32> to vector<8x8xf32>
    %248 = arith.mulf %246, %247 : vector<8x8xf32>
    %249 = arith.addf %244, %248 : vector<8x8xf32>
    %250 = arith.negf %249 : vector<8x8xf32>
    %251 = math.exp %250 : vector<8x8xf32>
    %cst_94 = arith.constant 1.000000e+00 : f32
    %252 = vector.broadcast %cst_94 : f32 to vector<8x8xf32>
    %253 = arith.addf %252, %251 : vector<8x8xf32>
    %254 = arith.divf %252, %253 : vector<8x8xf32>
    %255 = math.tanh %249 : vector<8x8xf32>
    %256 = vector.extract_strided_slice %254 {offsets = [0, 0], sizes = [2, 8], strides = [1, 1]} : vector<8x8xf32> to vector<2x8xf32>
    %257 = vector.extract_strided_slice %254 {offsets = [2, 0], sizes = [2, 8], strides = [1, 1]} : vector<8x8xf32> to vector<2x8xf32>
    %258 = vector.extract_strided_slice %255 {offsets = [4, 0], sizes = [2, 8], strides = [1, 1]} : vector<8x8xf32> to vector<2x8xf32>
    %259 = vector.extract_strided_slice %254 {offsets = [6, 0], sizes = [2, 8], strides = [1, 1]} : vector<8x8xf32> to vector<2x8xf32>
    %260 = arith.mulf %257, %234 : vector<2x8xf32>
    %261 = arith.mulf %256, %258 : vector<2x8xf32>
    %262 = arith.addf %260, %261 : vector<2x8xf32>
    %263 = math.tanh %262 : vector<2x8xf32>
    %264 = arith.mulf %259, %263 : vector<2x8xf32>
    %c12 = arith.constant 12 : index
    %c0_95 = arith.constant 0 : index
    %265 = vector.load %arg9[%c12, %c0_95] : memref<16x8xf32, #tpu.memory_space<vmem>>, vector<2x8xf32>
    tpu.vector_store %arg9[%c12, %c0_95], %264 {strides = array<i32>} : memref<16x8xf32, #tpu.memory_space<vmem>>, vector<2x8xf32>,
    %c7_96 = arith.constant 7 : index
    %c0_97 = arith.constant 0 : index
    %c0_98 = arith.constant 0 : index
    %266 = vector.load %arg8[%c7_96, %c0_97, %c0_98] : memref<8x8x8xf32, #tpu.memory_space<vmem>>, vector<1x8x8xf32>
    %267 = vector.shape_cast %266 : vector<1x8x8xf32> to vector<8x8xf32>
    %268 = vector.extract_strided_slice %264 {offsets = [0, 0], sizes = [1, 8], strides = [1, 1]} : vector<2x8xf32> to vector<1x8xf32>
    %269 = vector.broadcast %66 : vector<8x1xf32> to vector<8x8xf32>
    %270 = vector.broadcast %268 : vector<1x8xf32> to vector<8x8xf32>
    %271 = arith.mulf %269, %270 : vector<8x8xf32>
    %272 = arith.addf %267, %271 : vector<8x8xf32>
    %273 = vector.extract_strided_slice %264 {offsets = [1, 0], sizes = [1, 8], strides = [1, 1]} : vector<2x8xf32> to vector<1x8xf32>
    %274 = vector.broadcast %67 : vector<8x1xf32> to vector<8x8xf32>
    %275 = vector.broadcast %273 : vector<1x8xf32> to vector<8x8xf32>
    %276 = arith.mulf %274, %275 : vector<8x8xf32>
    %277 = arith.addf %272, %276 : vector<8x8xf32>
    %278 = arith.negf %277 : vector<8x8xf32>
    %279 = math.exp %278 : vector<8x8xf32>
    %cst_99 = arith.constant 1.000000e+00 : f32
    %280 = vector.broadcast %cst_99 : f32 to vector<8x8xf32>
    %281 = arith.addf %280, %279 : vector<8x8xf32>
    %282 = arith.divf %280, %281 : vector<8x8xf32>
    %283 = math.tanh %277 : vector<8x8xf32>
    %284 = vector.extract_strided_slice %282 {offsets = [0, 0], sizes = [2, 8], strides = [1, 1]} : vector<8x8xf32> to vector<2x8xf32>
    %285 = vector.extract_strided_slice %282 {offsets = [2, 0], sizes = [2, 8], strides = [1, 1]} : vector<8x8xf32> to vector<2x8xf32>
    %286 = vector.extract_strided_slice %283 {offsets = [4, 0], sizes = [2, 8], strides = [1, 1]} : vector<8x8xf32> to vector<2x8xf32>
    %287 = vector.extract_strided_slice %282 {offsets = [6, 0], sizes = [2, 8], strides = [1, 1]} : vector<8x8xf32> to vector<2x8xf32>
    %288 = arith.mulf %285, %262 : vector<2x8xf32>
    %289 = arith.mulf %284, %286 : vector<2x8xf32>
    %290 = arith.addf %288, %289 : vector<2x8xf32>
    %291 = math.tanh %290 : vector<2x8xf32>
    %292 = arith.mulf %287, %291 : vector<2x8xf32>
    %c14 = arith.constant 14 : index
    %c0_100 = arith.constant 0 : index
    %293 = vector.load %arg9[%c14, %c0_100] : memref<16x8xf32, #tpu.memory_space<vmem>>, vector<2x8xf32>
    tpu.vector_store %arg9[%c14, %c0_100], %292 {strides = array<i32>} : memref<16x8xf32, #tpu.memory_space<vmem>>, vector<2x8xf32>,
    %c0_101 = arith.constant 0 : index
    %c0_102 = arith.constant 0 : index
    %294 = vector.load %arg5[%c0_101, %c0_102] : memref<32x16xf32, #tpu.memory_space<vmem>>, vector<32x16xf32>
    %c0_103 = arith.constant 0 : index
    %c0_104 = arith.constant 0 : index
    %295 = vector.load %arg9[%c0_103, %c0_104] : memref<16x8xf32, #tpu.memory_space<vmem>>, vector<16x8xf32>
    %cst_105 = arith.constant dense<0.000000e+00> : vector<32x8xf32>
    %296 = tpu.matmul %294, %295, %cst_105 {dimension_numbers = #tpu.dot_dimension_numbers<[1], [0], [0], [1], [0, 0, 1, 1], [], []>} : vector<32x16xf32>, vector<16x8xf32>, vector<32x8xf32> -> vector<32x8xf32>
    %c0_106 = arith.constant 0 : index
    %c0_107 = arith.constant 0 : index
    %297 = vector.load %arg6[%c0_106, %c0_107] : memref<32x1xf32, #tpu.memory_space<vmem>>, vector<32x1xf32>
    %298 = vector.broadcast %297 : vector<32x1xf32> to vector<32x8xf32>
    %299 = arith.addf %296, %298 : vector<32x8xf32>
    %c0_108 = arith.constant 0 : index
    %c0_109 = arith.constant 0 : index
    %300 = vector.load %arg7[%c0_108, %c0_109] : memref<32x8xf32, #tpu.memory_space<vmem>>, vector<32x8xf32>
    tpu.vector_store %arg7[%c0_108, %c0_109], %299 {strides = array<i32>} : memref<32x8xf32, #tpu.memory_space<vmem>>, vector<32x8xf32>,
    return
  }
  func.func @transform_0(%arg0: i32) -> (i32, i32, i32) {
    %c0_i32 = arith.constant 0 : i32
    %c0_i32_0 = arith.constant 0 : i32
    %c0_i32_1 = arith.constant 0 : i32
    return %c0_i32, %c0_i32_0, %arg0 : i32, i32, i32
  }
  func.func @transform_1(%arg0: i32) -> (i32, i32) {
    %c0_i32 = arith.constant 0 : i32
    %c0_i32_0 = arith.constant 0 : i32
    %c0_i32_1 = arith.constant 0 : i32
    return %c0_i32, %c0_i32_0 : i32, i32
  }
  func.func @transform_2(%arg0: i32) -> (i32, i32) {
    %c0_i32 = arith.constant 0 : i32
    %c0_i32_0 = arith.constant 0 : i32
    %c0_i32_1 = arith.constant 0 : i32
    return %c0_i32, %c0_i32_0 : i32, i32
  }
  func.func @transform_3(%arg0: i32) -> (i32, i32) {
    %c0_i32 = arith.constant 0 : i32
    %c0_i32_0 = arith.constant 0 : i32
    %c0_i32_1 = arith.constant 0 : i32
    return %c0_i32, %c0_i32_0 : i32, i32
  }
  func.func @transform_4(%arg0: i32) -> (i32, i32) {
    %c0_i32 = arith.constant 0 : i32
    %c0_i32_0 = arith.constant 0 : i32
    %c0_i32_1 = arith.constant 0 : i32
    return %c0_i32, %c0_i32_0 : i32, i32
  }
  func.func @transform_5(%arg0: i32) -> (i32, i32) {
    %c0_i32 = arith.constant 0 : i32
    %c0_i32_0 = arith.constant 0 : i32
    %c0_i32_1 = arith.constant 0 : i32
    return %c0_i32, %c0_i32_0 : i32, i32
  }
  func.func @transform_6(%arg0: i32) -> (i32, i32) {
    %c0_i32 = arith.constant 0 : i32
    %c0_i32_0 = arith.constant 0 : i32
    return %c0_i32, %arg0 : i32, i32
  }
}

</mosaic_0001>

<llo_original>
// kernel: tpu_custom_call.1
$region0: #{tpu_custom_call.1}
  #allocation0 [shape = 'u32[]', space=smem, size = 0x4, offset = 0x4, fixed_abs, tag = 'smem constant byte address 0x4 - core index']
  #allocation1 [shape = 'u32[144,128]{1,0:T(1,128)}', space=vmem, size = 0x12000, scoped, tag = 'internal scratch']
  #allocation2 [shape = 'f32[8,8,8]{2,1,0:T(8,128)}', space=vmem, size = 0x8000, scoped, tag = 'scratch operand']
  #allocation3 [shape = 'f32[16,8]{1,0:T(8,128)}', space=vmem, size = 0x2000, scoped, tag = 'scratch operand']
  %s0 = inlined_call_operand.vmem [shape: f32[8,4,8], index: 0, kind: input, shape index: {}]
  %s1 = inlined_call_operand.vmem [shape: f32[8,4], index: 1, kind: input, shape index: {}]
  %s2 = inlined_call_operand.vmem [shape: f32[8,2], index: 2, kind: input, shape index: {}]
  %s3 = inlined_call_operand.vmem [shape: f32[8,1], index: 3, kind: input, shape index: {}]
  %s4 = inlined_call_operand.vmem [shape: f32[32,16], index: 4, kind: input, shape index: {}]
  %s5 = inlined_call_operand.vmem [shape: f32[32,1], index: 5, kind: input, shape index: {}]
  %s6 = inlined_call_operand.vmem [shape: f32[32,8], index: 6, kind: output, shape index: {}]
  %s7 = sld [smem:[#allocation0]]
  $region34: #{tpu_custom_call.1} parent=0
    _
  %s9 = ssub.s32 1, %s7
  %s10 = scalar_select 0, %s9, %s7
  // Predicated region
  $region2: #{tpu_custom_call.1} parent=0 // pred_check
    _
  $region3: #{tpu_custom_call.1} parent=0 // pred_check_branch
    %12 = sbr.rel (0) target = $region5
  $region4: #{tpu_custom_call.1} parent=0 // pred_region
    _
  $region5: #{tpu_custom_call.1} parent=0 // pred_fallthru
    _
  // Predicated region
  $region6: #{tpu_custom_call.1} parent=0 // pred_check
    _
  $region7: #{tpu_custom_call.1} parent=0 // pred_check_branch
    %14 = sbr.rel (0) target = $region9
  $region8: #{tpu_custom_call.1} parent=0 // pred_region
    _
  $region9: #{tpu_custom_call.1} parent=0 // pred_fallthru
    _
  // Predicated region
  $region10: #{tpu_custom_call.1} parent=0 // pred_check
    _
  $region11: #{tpu_custom_call.1} parent=0 // pred_check_branch
    %16 = sbr.rel (0) target = $region13
  $region12: #{tpu_custom_call.1} parent=0 // pred_region
    _
  $region13: #{tpu_custom_call.1} parent=0 // pred_fallthru
    _
  // Predicated region
  $region14: #{tpu_custom_call.1} parent=0 // pred_check
    _
  $region15: #{tpu_custom_call.1} parent=0 // pred_check_branch
    %18 = sbr.rel (0) target = $region17
  $region16: #{tpu_custom_call.1} parent=0 // pred_region
    _
  $region17: #{tpu_custom_call.1} parent=0 // pred_fallthru
    _
  // Predicated region
  $region18: #{tpu_custom_call.1} parent=0 // pred_check
    _
  $region19: #{tpu_custom_call.1} parent=0 // pred_check_branch
    %20 = sbr.rel (0) target = $region21
  $region20: #{tpu_custom_call.1} parent=0 // pred_region
    _
  $region21: #{tpu_custom_call.1} parent=0 // pred_fallthru
    _
  // Predicated region
  $region22: #{tpu_custom_call.1} parent=0 // pred_check
    _
  $region23: #{tpu_custom_call.1} parent=0 // pred_check_branch
    %22 = sbr.rel (0) target = $region25
  $region24: #{tpu_custom_call.1} parent=0 // pred_region
    _
  $region25: #{tpu_custom_call.1} parent=0 // pred_fallthru
    _
  %v23 = vld [vmem:[%s1] sm:$0xff]
  %v24 = vld [vmem:[%s3] sm:$0xff]
  %v25 = vld [vmem:[%s0] sm:$0xf]
  %27 = vset.pattern.permute.xlu0 0
  %28 = vperm.xlu0 %27, %v24
  %v29 = vpop.permute.xlu0 %28
  %vm31 = vcmask 31744
  %v33 = vsel %vm31, %v23, 0
  %vm35 = vcmask 1043456
  %v37 = vsel %vm35, %v25, 0
  %39 = vmatprep.subr.mxu0 0.0
  %40 = vmatpush1.msra.mxu0 %v37
  %41 = vmatprep.subr.mxu0 0.0
  %42 = vmatpush1.msra.mxu0 0.0
  %43 = vmatprep.subr.mxu0 0.0
  %44 = vmatpush1.msra.mxu0 0.0
  %45 = vmatprep.subr.mxu0 0.0
  %46 = vmatpush1.msra.mxu0 0.0
  %47 = vmatprep.subr.mxu0 0.0
  %48 = vmatpush1.msra.mxu0 0.0
  %49 = vmatprep.subr.mxu0 0.0
  %50 = vmatpush1.msra.mxu0 0.0
  %51 = vmatprep.subr.mxu0 0.0
  %52 = vmatpush1.msra.mxu0 0.0
  %53 = vmatprep.subr.mxu0 0.0
  %54 = vmatpush1.msra.mxu0 0.0
  %55 = vmatprep.subr.mxu0 0.0
  %56 = vmatpush1.msra.mxu0 0.0
  %57 = vmatprep.subr.mxu0 0.0
  %58 = vmatpush1.msra.mxu0 0.0
  %59 = vmatprep.subr.mxu0 0.0
  %60 = vmatpush1.msra.mxu0 0.0
  %61 = vmatprep.subr.mxu0 0.0
  %62 = vmatpush1.msra.mxu0 0.0
  %63 = vmatprep.subr.mxu0 0.0
  %64 = vmatpush1.msra.mxu0 0.0
  %65 = vmatprep.subr.mxu0 0.0
  %66 = vmatpush1.msra.mxu0 0.0
  %67 = vmatprep.subr.mxu0 0.0
  %68 = vmatpush1.msra.mxu0 0.0
  %69 = vmatprep.subr.mxu0 0.0
  %70 = vmatpush1.msra.mxu0 0.0
  %71 = vmatprep.subr.mxu0 0.0
  %72 = vmatpush1.msra.mxu0 0.0
  %73 = vmatprep.subr.mxu0 0.0
  %74 = vmatpush1.msra.mxu0 0.0
  %75 = vmatprep.subr.mxu0 0.0
  %76 = vmatpush1.msra.mxu0 0.0
  %77 = vmatprep.subr.mxu0 0.0
  %78 = vmatpush1.msra.mxu0 0.0
  %79 = vmatprep.subr.mxu0 0.0
  %80 = vmatpush1.msra.mxu0 0.0
  %81 = vmatprep.subr.mxu0 0.0
  %82 = vmatpush1.msra.mxu0 0.0
  %83 = vmatprep.subr.mxu0 0.0
  %84 = vmatpush1.msra.mxu0 0.0
  %85 = vmatprep.subr.mxu0 0.0
  %86 = vmatpush1.msra.mxu0 0.0
  %87 = vmatprep.subr.mxu0 0.0
  %88 = vmatpush1.msra.mxu0 0.0
  %89 = vmatprep.subr.mxu0 0.0
  %90 = vmatpush1.msra.mxu0 0.0
  %91 = vmatprep.subr.mxu0 0.0
  %92 = vmatpush1.msra.mxu0 0.0
  %93 = vmatprep.subr.mxu0 0.0
  %94 = vmatpush1.msra.mxu0 0.0
  %95 = vmatprep.subr.mxu0 0.0
  %96 = vmatpush1.msra.mxu0 0.0
  %97 = vmatprep.subr.mxu0 0.0
  %98 = vmatpush1.msra.mxu0 0.0
  %99 = vmatprep.subr.mxu0 0.0
  %100 = vmatpush1.msra.mxu0 0.0
  %101 = vmatprep.subr.mxu0 0.0
  %102 = vmatpush1.msra.mxu0 0.0
  %103 = vmatprep.mubr.f32.mxu0 0.0
  %104 = vmatmul.mubr.f32.gmra.mrb[0].mxu0 %v33
  %v105 = vpop.f32.mrb[0].mxu0
  %v106 = vadd.f32 %v29, %v105
  %v107 = vpop.f32.mrb[0].mxu0
  %108 = vdwg.mxu0
  %vm109 = vcmask 64512
  %110 = vst.msk [vmem:[#allocation2] sm:$0xff] %vm109, %v106
  %s111 = scalar_lea.vmem %s0, 4
  %v112 = vld [vmem:[%s111] sm:$0xf]
  %v114 = vsel %vm35, %v112, 0
  %116 = vmatprep.subr.mxu0 0.0
  %117 = vmatpush1.msra.mxu0 %v114
  %118 = vmatprep.subr.mxu0 0.0
  %119 = vmatpush1.msra.mxu0 0.0
  %120 = vmatprep.subr.mxu0 0.0
  %121 = vmatpush1.msra.mxu0 0.0
  %122 = vmatprep.subr.mxu0 0.0
  %123 = vmatpush1.msra.mxu0 0.0
  %124 = vmatprep.subr.mxu0 0.0
  %125 = vmatpush1.msra.mxu0 0.0
  %126 = vmatprep.subr.mxu0 0.0
  %127 = vmatpush1.msra.mxu0 0.0
  %128 = vmatprep.subr.mxu0 0.0
  %129 = vmatpush1.msra.mxu0 0.0
  %130 = vmatprep.subr.mxu0 0.0
  %131 = vmatpush1.msra.mxu0 0.0
  %132 = vmatprep.subr.mxu0 0.0
  %133 = vmatpush1.msra.mxu0 0.0
  %134 = vmatprep.subr.mxu0 0.0
  %135 = vmatpush1.msra.mxu0 0.0
  %136 = vmatprep.subr.mxu0 0.0
  %137 = vmatpush1.msra.mxu0 0.0
  %138 = vmatprep.subr.mxu0 0.0
  %139 = vmatpush1.msra.mxu0 0.0
  %140 = vmatprep.subr.mxu0 0.0
  %141 = vmatpush1.msra.mxu0 0.0
  %142 = vmatprep.subr.mxu0 0.0
  %143 = vmatpush1.msra.mxu0 0.0
  %144 = vmatprep.subr.mxu0 0.0
  %145 = vmatpush1.msra.mxu0 0.0
  %146 = vmatprep.subr.mxu0 0.0
  %147 = vmatpush1.msra.mxu0 0.0
  %148 = vmatprep.subr.mxu0 0.0
  %149 = vmatpush1.msra.mxu0 0.0
  %150 = vmatprep.subr.mxu0 0.0
  %151 = vmatpush1.msra.mxu0 0.0
  %152 = vmatprep.subr.mxu0 0.0
  %153 = vmatpush1.msra.mxu0 0.0
  %154 = vmatprep.subr.mxu0 0.0
  %155 = vmatpush1.msra.mxu0 0.0
  %156 = vmatprep.subr.mxu0 0.0
  %157 = vmatpush1.msra.mxu0 0.0
  %158 = vmatprep.subr.mxu0 0.0
  %159 = vmatpush1.msra.mxu0 0.0
  %160 = vmatprep.subr.mxu0 0.0
  %161 = vmatpush1.msra.mxu0 0.0
  %162 = vmatprep.subr.mxu0 0.0
  %163 = vmatpush1.msra.mxu0 0.0
  %164 = vmatprep.subr.mxu0 0.0
  %165 = vmatpush1.msra.mxu0 0.0
  %166 = vmatprep.subr.mxu0 0.0
  %167 = vmatpush1.msra.mxu0 0.0
  %168 = vmatprep.subr.mxu0 0.0
  %169 = vmatpush1.msra.mxu0 0.0
  %170 = vmatprep.subr.mxu0 0.0
  %171 = vmatpush1.msra.mxu0 0.0
  %172 = vmatprep.subr.mxu0 0.0
  %173 = vmatpush1.msra.mxu0 0.0
  %174 = vmatprep.subr.mxu0 0.0
  %175 = vmatpush1.msra.mxu0 0.0
  %176 = vmatprep.subr.mxu0 0.0
  %177 = vmatpush1.msra.mxu0 0.0
  %178 = vmatprep.subr.mxu0 0.0
  %179 = vmatpush1.msra.mxu0 0.0
  %180 = vmatprep.mubr.f32.mxu0 0.0
  %181 = vmatmul.mubr.f32.gmra.mrb[0].mxu0 %v33
  %v182 = vpop.f32.mrb[0].mxu0
  %v183 = vadd.f32 %v29, %v182
  %v184 = vpop.f32.mrb[0].mxu0
  %185 = vdwg.mxu0
  %s186 = scalar_lea.vmem [#allocation2], 8
  %187 = vst.msk [vmem:[%s186] sm:$0xff] %vm109, %v183
  %s188 = scalar_lea.vmem %s0, 8
  %v189 = vld [vmem:[%s188] sm:$0xf]
  %v191 = vsel %vm35, %v189, 0
  %193 = vmatprep.subr.mxu0 0.0
  %194 = vmatpush1.msra.mxu0 %v191
  %195 = vmatprep.subr.mxu0 0.0
  %196 = vmatpush1.msra.mxu0 0.0
  %197 = vmatprep.subr.mxu0 0.0
  %198 = vmatpush1.msra.mxu0 0.0
  %199 = vmatprep.subr.mxu0 0.0
  %200 = vmatpush1.msra.mxu0 0.0
  %201 = vmatprep.subr.mxu0 0.0
  %202 = vmatpush1.msra.mxu0 0.0
  %203 = vmatprep.subr.mxu0 0.0
  %204 = vmatpush1.msra.mxu0 0.0
  %205 = vmatprep.subr.mxu0 0.0
  %206 = vmatpush1.msra.mxu0 0.0
  %207 = vmatprep.subr.mxu0 0.0
  %208 = vmatpush1.msra.mxu0 0.0
  %209 = vmatprep.subr.mxu0 0.0
  %210 = vmatpush1.msra.mxu0 0.0
  %211 = vmatprep.subr.mxu0 0.0
  %212 = vmatpush1.msra.mxu0 0.0
  %213 = vmatprep.subr.mxu0 0.0
  %214 = vmatpush1.msra.mxu0 0.0
  %215 = vmatprep.subr.mxu0 0.0
  %216 = vmatpush1.msra.mxu0 0.0
  %217 = vmatprep.subr.mxu0 0.0
  %218 = vmatpush1.msra.mxu0 0.0
  %219 = vmatprep.subr.mxu0 0.0
  %220 = vmatpush1.msra.mxu0 0.0
  %221 = vmatprep.subr.mxu0 0.0
  %222 = vmatpush1.msra.mxu0 0.0
  %223 = vmatprep.subr.mxu0 0.0
  %224 = vmatpush1.msra.mxu0 0.0
  %225 = vmatprep.subr.mxu0 0.0
  %226 = vmatpush1.msra.mxu0 0.0
  %227 = vmatprep.subr.mxu0 0.0
  %228 = vmatpush1.msra.mxu0 0.0
  %229 = vmatprep.subr.mxu0 0.0
  %230 = vmatpush1.msra.mxu0 0.0
  %231 = vmatprep.subr.mxu0 0.0
  %232 = vmatpush1.msra.mxu0 0.0
  %233 = vmatprep.subr.mxu0 0.0
  %234 = vmatpush1.msra.mxu0 0.0
  %235 = vmatprep.subr.mxu0 0.0
  %236 = vmatpush1.msra.mxu0 0.0
  %237 = vmatprep.subr.mxu0 0.0
  %238 = vmatpush1.msra.mxu0 0.0
  %239 = vmatprep.subr.mxu0 0.0
  %240 = vmatpush1.msra.mxu0 0.0
  %241 = vmatprep.subr.mxu0 0.0
  %242 = vmatpush1.msra.mxu0 0.0
  %243 = vmatprep.subr.mxu0 0.0
  %244 = vmatpush1.msra.mxu0 0.0
  %245 = vmatprep.subr.mxu0 0.0
  %246 = vmatpush1.msra.mxu0 0.0
  %247 = vmatprep.subr.mxu0 0.0
  %248 = vmatpush1.msra.mxu0 0.0
  %249 = vmatprep.subr.mxu0 0.0
  %250 = vmatpush1.msra.mxu0 0.0
  %251 = vmatprep.subr.mxu0 0.0
  %252 = vmatpush1.msra.mxu0 0.0
  %253 = vmatprep.subr.mxu0 0.0
  %254 = vmatpush1.msra.mxu0 0.0
  %255 = vmatprep.subr.mxu0 0.0
  %256 = vmatpush1.msra.mxu0 0.0
  %257 = vmatprep.mubr.f32.mxu0 0.0
  %258 = vmatmul.mubr.f32.gmra.mrb[0].mxu0 %v33
  %v259 = vpop.f32.mrb[0].mxu0
  %v260 = vadd.f32 %v29, %v259
  %v261 = vpop.f32.mrb[0].mxu0
  %262 = vdwg.mxu0
  %s263 = scalar_lea.vmem [#allocation2], 16
  %264 = vst.msk [vmem:[%s263] sm:$0xff] %vm109, %v260
  %s265 = scalar_lea.vmem %s0, 12
  %v266 = vld [vmem:[%s265] sm:$0xf]
  %v268 = vsel %vm35, %v266, 0
  %270 = vmatprep.subr.mxu0 0.0
  %271 = vmatpush1.msra.mxu0 %v268
  %272 = vmatprep.subr.mxu0 0.0
  %273 = vmatpush1.msra.mxu0 0.0
  %274 = vmatprep.subr.mxu0 0.0
  %275 = vmatpush1.msra.mxu0 0.0
  %276 = vmatprep.subr.mxu0 0.0
  %277 = vmatpush1.msra.mxu0 0.0
  %278 = vmatprep.subr.mxu0 0.0
  %279 = vmatpush1.msra.mxu0 0.0
  %280 = vmatprep.subr.mxu0 0.0
  %281 = vmatpush1.msra.mxu0 0.0
  %282 = vmatprep.subr.mxu0 0.0
  %283 = vmatpush1.msra.mxu0 0.0
  %284 = vmatprep.subr.mxu0 0.0
  %285 = vmatpush1.msra.mxu0 0.0
  %286 = vmatprep.subr.mxu0 0.0
  %287 = vmatpush1.msra.mxu0 0.0
  %288 = vmatprep.subr.mxu0 0.0
  %289 = vmatpush1.msra.mxu0 0.0
  %290 = vmatprep.subr.mxu0 0.0
  %291 = vmatpush1.msra.mxu0 0.0
  %292 = vmatprep.subr.mxu0 0.0
  %293 = vmatpush1.msra.mxu0 0.0
  %294 = vmatprep.subr.mxu0 0.0
  %295 = vmatpush1.msra.mxu0 0.0
  %296 = vmatprep.subr.mxu0 0.0
  %297 = vmatpush1.msra.mxu0 0.0
  %298 = vmatprep.subr.mxu0 0.0
  %299 = vmatpush1.msra.mxu0 0.0
  %300 = vmatprep.subr.mxu0 0.0
  %301 = vmatpush1.msra.mxu0 0.0
  %302 = vmatprep.subr.mxu0 0.0
  %303 = vmatpush1.msra.mxu0 0.0
  %304 = vmatprep.subr.mxu0 0.0
  %305 = vmatpush1.msra.mxu0 0.0
  %306 = vmatprep.subr.mxu0 0.0
  %307 = vmatpush1.msra.mxu0 0.0
  %308 = vmatprep.subr.mxu0 0.0
  %309 = vmatpush1.msra.mxu0 0.0
  %310 = vmatprep.subr.mxu0 0.0
  %311 = vmatpush1.msra.mxu0 0.0
  %312 = vmatprep.subr.mxu0 0.0
  %313 = vmatpush1.msra.mxu0 0.0
  %314 = vmatprep.subr.mxu0 0.0
  %315 = vmatpush1.msra.mxu0 0.0
  %316 = vmatprep.subr.mxu0 0.0
  %317 = vmatpush1.msra.mxu0 0.0
  %318 = vmatprep.subr.mxu0 0.0
  %319 = vmatpush1.msra.mxu0 0.0
  %320 = vmatprep.subr.mxu0 0.0
  %321 = vmatpush1.msra.mxu0 0.0
  %322 = vmatprep.subr.mxu0 0.0
  %323 = vmatpush1.msra.mxu0 0.0
  %324 = vmatprep.subr.mxu0 0.0
  %325 = vmatpush1.msra.mxu0 0.0
  %326 = vmatprep.subr.mxu0 0.0
  %327 = vmatpush1.msra.mxu0 0.0
  %328 = vmatprep.subr.mxu0 0.0
  %329 = vmatpush1.msra.mxu0 0.0
  %330 = vmatprep.subr.mxu0 0.0
  %331 = vmatpush1.msra.mxu0 0.0
  %332 = vmatprep.subr.mxu0 0.0
  %333 = vmatpush1.msra.mxu0 0.0
  %334 = vmatprep.mubr.f32.mxu0 0.0
  %335 = vmatmul.mubr.f32.gmra.mrb[0].mxu0 %v33
  %v336 = vpop.f32.mrb[0].mxu0
  %v337 = vadd.f32 %v29, %v336
  %v338 = vpop.f32.mrb[0].mxu0
  %339 = vdwg.mxu0
  %s340 = scalar_lea.vmem [#allocation2], 24
  %341 = vst.msk [vmem:[%s340] sm:$0xff] %vm109, %v337
  %s342 = scalar_lea.vmem %s0, 16
  %v343 = vld [vmem:[%s342] sm:$0xf]
  %v345 = vsel %vm35, %v343, 0
  %347 = vmatprep.subr.mxu0 0.0
  %348 = vmatpush1.msra.mxu0 %v345
  %349 = vmatprep.subr.mxu0 0.0
  %350 = vmatpush1.msra.mxu0 0.0
  %351 = vmatprep.subr.mxu0 0.0
  %352 = vmatpush1.msra.mxu0 0.0
  %353 = vmatprep.subr.mxu0 0.0
  %354 = vmatpush1.msra.mxu0 0.0
  %355 = vmatprep.subr.mxu0 0.0
  %356 = vmatpush1.msra.mxu0 0.0
  %357 = vmatprep.subr.mxu0 0.0
  %358 = vmatpush1.msra.mxu0 0.0
  %359 = vmatprep.subr.mxu0 0.0
  %360 = vmatpush1.msra.mxu0 0.0
  %361 = vmatprep.subr.mxu0 0.0
  %362 = vmatpush1.msra.mxu0 0.0
  %363 = vmatprep.subr.mxu0 0.0
  %364 = vmatpush1.msra.mxu0 0.0
  %365 = vmatprep.subr.mxu0 0.0
  %366 = vmatpush1.msra.mxu0 0.0
  %367 = vmatprep.subr.mxu0 0.0
  %368 = vmatpush1.msra.mxu0 0.0
  %369 = vmatprep.subr.mxu0 0.0
  %370 = vmatpush1.msra.mxu0 0.0
  %371 = vmatprep.subr.mxu0 0.0
  %372 = vmatpush1.msra.mxu0 0.0
  %373 = vmatprep.subr.mxu0 0.0
  %374 = vmatpush1.msra.mxu0 0.0
  %375 = vmatprep.subr.mxu0 0.0
  %376 = vmatpush1.msra.mxu0 0.0
  %377 = vmatprep.subr.mxu0 0.0
  %378 = vmatpush1.msra.mxu0 0.0
  %379 = vmatprep.subr.mxu0 0.0
  %380 = vmatpush1.msra.mxu0 0.0
  %381 = vmatprep.subr.mxu0 0.0
  %382 = vmatpush1.msra.mxu0 0.0
  %383 = vmatprep.subr.mxu0 0.0
  %384 = vmatpush1.msra.mxu0 0.0
  %385 = vmatprep.subr.mxu0 0.0
  %386 = vmatpush1.msra.mxu0 0.0
  %387 = vmatprep.subr.mxu0 0.0
  %388 = vmatpush1.msra.mxu0 0.0
  %389 = vmatprep.subr.mxu0 0.0
  %390 = vmatpush1.msra.mxu0 0.0
  %391 = vmatprep.subr.mxu0 0.0
  %392 = vmatpush1.msra.mxu0 0.0
  %393 = vmatprep.subr.mxu0 0.0
  %394 = vmatpush1.msra.mxu0 0.0
  %395 = vmatprep.subr.mxu0 0.0
  %396 = vmatpush1.msra.mxu0 0.0
  %397 = vmatprep.subr.mxu0 0.0
  %398 = vmatpush1.msra.mxu0 0.0
  %399 = vmatprep.subr.mxu0 0.0
  %400 = vmatpush1.msra.mxu0 0.0
  %401 = vmatprep.subr.mxu0 0.0
  %402 = vmatpush1.msra.mxu0 0.0
  %403 = vmatprep.subr.mxu0 0.0
  %404 = vmatpush1.msra.mxu0 0.0
  %405 = vmatprep.subr.mxu0 0.0
  %406 = vmatpush1.msra.mxu0 0.0
  %407 = vmatprep.subr.mxu0 0.0
  %408 = vmatpush1.msra.mxu0 0.0
  %409 = vmatprep.subr.mxu0 0.0
  %410 = vmatpush1.msra.mxu0 0.0
  %411 = vmatprep.mubr.f32.mxu0 0.0
  %412 = vmatmul.mubr.f32.gmra.mrb[0].mxu0 %v33
  %v413 = vpop.f32.mrb[0].mxu0
  %v414 = vadd.f32 %v29, %v413
  %v415 = vpop.f32.mrb[0].mxu0
  %416 = vdwg.mxu0
  %s417 = scalar_lea.vmem [#allocation2], 32
  %418 = vst.msk [vmem:[%s417] sm:$0xff] %vm109, %v414
  %s419 = scalar_lea.vmem %s0, 20
  %v420 = vld [vmem:[%s419] sm:$0xf]
  %v422 = vsel %vm35, %v420, 0
  %424 = vmatprep.subr.mxu0 0.0
  %425 = vmatpush1.msra.mxu0 %v422
  %426 = vmatprep.subr.mxu0 0.0
  %427 = vmatpush1.msra.mxu0 0.0
  %428 = vmatprep.subr.mxu0 0.0
  %429 = vmatpush1.msra.mxu0 0.0
  %430 = vmatprep.subr.mxu0 0.0
  %431 = vmatpush1.msra.mxu0 0.0
  %432 = vmatprep.subr.mxu0 0.0
  %433 = vmatpush1.msra.mxu0 0.0
  %434 = vmatprep.subr.mxu0 0.0
  %435 = vmatpush1.msra.mxu0 0.0
  %436 = vmatprep.subr.mxu0 0.0
  %437 = vmatpush1.msra.mxu0 0.0
  %438 = vmatprep.subr.mxu0 0.0
  %439 = vmatpush1.msra.mxu0 0.0
  %440 = vmatprep.subr.mxu0 0.0
  %441 = vmatpush1.msra.mxu0 0.0
  %442 = vmatprep.subr.mxu0 0.0
  %443 = vmatpush1.msra.mxu0 0.0
  %444 = vmatprep.subr.mxu0 0.0
  %445 = vmatpush1.msra.mxu0 0.0
  %446 = vmatprep.subr.mxu0 0.0
  %447 = vmatpush1.msra.mxu0 0.0
  %448 = vmatprep.subr.mxu0 0.0
  %449 = vmatpush1.msra.mxu0 0.0
  %450 = vmatprep.subr.mxu0 0.0
  %451 = vmatpush1.msra.mxu0 0.0
  %452 = vmatprep.subr.mxu0 0.0
  %453 = vmatpush1.msra.mxu0 0.0
  %454 = vmatprep.subr.mxu0 0.0
  %455 = vmatpush1.msra.mxu0 0.0
  %456 = vmatprep.subr.mxu0 0.0
  %457 = vmatpush1.msra.mxu0 0.0
  %458 = vmatprep.subr.mxu0 0.0
  %459 = vmatpush1.msra.mxu0 0.0
  %460 = vmatprep.subr.mxu0 0.0
  %461 = vmatpush1.msra.mxu0 0.0
  %462 = vmatprep.subr.mxu0 0.0
  %463 = vmatpush1.msra.mxu0 0.0
  %464 = vmatprep.subr.mxu0 0.0
  %465 = vmatpush1.msra.mxu0 0.0
  %466 = vmatprep.subr.mxu0 0.0
  %467 = vmatpush1.msra.mxu0 0.0
  %468 = vmatprep.subr.mxu0 0.0
  %469 = vmatpush1.msra.mxu0 0.0
  %470 = vmatprep.subr.mxu0 0.0
  %471 = vmatpush1.msra.mxu0 0.0
  %472 = vmatprep.subr.mxu0 0.0
  %473 = vmatpush1.msra.mxu0 0.0
  %474 = vmatprep.subr.mxu0 0.0
  %475 = vmatpush1.msra.mxu0 0.0
  %476 = vmatprep.subr.mxu0 0.0
  %477 = vmatpush1.msra.mxu0 0.0
  %478 = vmatprep.subr.mxu0 0.0
  %479 = vmatpush1.msra.mxu0 0.0
  %480 = vmatprep.subr.mxu0 0.0
  %481 = vmatpush1.msra.mxu0 0.0
  %482 = vmatprep.subr.mxu0 0.0
  %483 = vmatpush1.msra.mxu0 0.0
  %484 = vmatprep.subr.mxu0 0.0
  %485 = vmatpush1.msra.mxu0 0.0
  %486 = vmatprep.subr.mxu0 0.0
  %487 = vmatpush1.msra.mxu0 0.0
  %488 = vmatprep.mubr.f32.mxu0 0.0
  %489 = vmatmul.mubr.f32.gmra.mrb[0].mxu0 %v33
  %v490 = vpop.f32.mrb[0].mxu0
  %v491 = vadd.f32 %v29, %v490
  %v492 = vpop.f32.mrb[0].mxu0
  %493 = vdwg.mxu0
  %s494 = scalar_lea.vmem [#allocation2], 40
  %495 = vst.msk [vmem:[%s494] sm:$0xff] %vm109, %v491
  %s496 = scalar_lea.vmem %s0, 24
  %v497 = vld [vmem:[%s496] sm:$0xf]
  %v499 = vsel %vm35, %v497, 0
  %501 = vmatprep.subr.mxu0 0.0
  %502 = vmatpush1.msra.mxu0 %v499
  %503 = vmatprep.subr.mxu0 0.0
  %504 = vmatpush1.msra.mxu0 0.0
  %505 = vmatprep.subr.mxu0 0.0
  %506 = vmatpush1.msra.mxu0 0.0
  %507 = vmatprep.subr.mxu0 0.0
  %508 = vmatpush1.msra.mxu0 0.0
  %509 = vmatprep.subr.mxu0 0.0
  %510 = vmatpush1.msra.mxu0 0.0
  %511 = vmatprep.subr.mxu0 0.0
  %512 = vmatpush1.msra.mxu0 0.0
  %513 = vmatprep.subr.mxu0 0.0
  %514 = vmatpush1.msra.mxu0 0.0
  %515 = vmatprep.subr.mxu0 0.0
  %516 = vmatpush1.msra.mxu0 0.0
  %517 = vmatprep.subr.mxu0 0.0
  %518 = vmatpush1.msra.mxu0 0.0
  %519 = vmatprep.subr.mxu0 0.0
  %520 = vmatpush1.msra.mxu0 0.0
  %521 = vmatprep.subr.mxu0 0.0
  %522 = vmatpush1.msra.mxu0 0.0
  %523 = vmatprep.subr.mxu0 0.0
  %524 = vmatpush1.msra.mxu0 0.0
  %525 = vmatprep.subr.mxu0 0.0
  %526 = vmatpush1.msra.mxu0 0.0
  %527 = vmatprep.subr.mxu0 0.0
  %528 = vmatpush1.msra.mxu0 0.0
  %529 = vmatprep.subr.mxu0 0.0
  %530 = vmatpush1.msra.mxu0 0.0
  %531 = vmatprep.subr.mxu0 0.0
  %532 = vmatpush1.msra.mxu0 0.0
  %533 = vmatprep.subr.mxu0 0.0
  %534 = vmatpush1.msra.mxu0 0.0
  %535 = vmatprep.subr.mxu0 0.0
  %536 = vmatpush1.msra.mxu0 0.0
  %537 = vmatprep.subr.mxu0 0.0
  %538 = vmatpush1.msra.mxu0 0.0
  %539 = vmatprep.subr.mxu0 0.0
  %540 = vmatpush1.msra.mxu0 0.0
  %541 = vmatprep.subr.mxu0 0.0
  %542 = vmatpush1.msra.mxu0 0.0
  %543 = vmatprep.subr.mxu0 0.0
  %544 = vmatpush1.msra.mxu0 0.0
  %545 = vmatprep.subr.mxu0 0.0
  %546 = vmatpush1.msra.mxu0 0.0
  %547 = vmatprep.subr.mxu0 0.0
  %548 = vmatpush1.msra.mxu0 0.0
  %549 = vmatprep.subr.mxu0 0.0
  %550 = vmatpush1.msra.mxu0 0.0
  %551 = vmatprep.subr.mxu0 0.0
  %552 = vmatpush1.msra.mxu0 0.0
  %553 = vmatprep.subr.mxu0 0.0
  %554 = vmatpush1.msra.mxu0 0.0
  %555 = vmatprep.subr.mxu0 0.0
  %556 = vmatpush1.msra.mxu0 0.0
  %557 = vmatprep.subr.mxu0 0.0
  %558 = vmatpush1.msra.mxu0 0.0
  %559 = vmatprep.subr.mxu0 0.0
  %560 = vmatpush1.msra.mxu0 0.0
  %561 = vmatprep.subr.mxu0 0.0
  %562 = vmatpush1.msra.mxu0 0.0
  %563 = vmatprep.subr.mxu0 0.0
  %564 = vmatpush1.msra.mxu0 0.0
  %565 = vmatprep.mubr.f32.mxu0 0.0
  %566 = vmatmul.mubr.f32.gmra.mrb[0].mxu0 %v33
  %v567 = vpop.f32.mrb[0].mxu0
  %v568 = vadd.f32 %v29, %v567
  %v569 = vpop.f32.mrb[0].mxu0
  %570 = vdwg.mxu0
  %s571 = scalar_lea.vmem [#allocation2], 48
  %572 = vst.msk [vmem:[%s571] sm:$0xff] %vm109, %v568
  %s573 = scalar_lea.vmem %s0, 28
  %v574 = vld [vmem:[%s573] sm:$0xf]
  %v576 = vsel %vm35, %v574, 0
  %578 = vmatprep.subr.mxu0 0.0
  %579 = vmatpush1.msra.mxu0 %v576
  %580 = vmatprep.subr.mxu0 0.0
  %581 = vmatpush1.msra.mxu0 0.0
  %582 = vmatprep.subr.mxu0 0.0
  %583 = vmatpush1.msra.mxu0 0.0
  %584 = vmatprep.subr.mxu0 0.0
  %585 = vmatpush1.msra.mxu0 0.0
  %586 = vmatprep.subr.mxu0 0.0
  %587 = vmatpush1.msra.mxu0 0.0
  %588 = vmatprep.subr.mxu0 0.0
  %589 = vmatpush1.msra.mxu0 0.0
  %590 = vmatprep.subr.mxu0 0.0
  %591 = vmatpush1.msra.mxu0 0.0
  %592 = vmatprep.subr.mxu0 0.0
  %593 = vmatpush1.msra.mxu0 0.0
  %594 = vmatprep.subr.mxu0 0.0
  %595 = vmatpush1.msra.mxu0 0.0
  %596 = vmatprep.subr.mxu0 0.0
  %597 = vmatpush1.msra.mxu0 0.0
  %598 = vmatprep.subr.mxu0 0.0
  %599 = vmatpush1.msra.mxu0 0.0
  %600 = vmatprep.subr.mxu0 0.0
  %601 = vmatpush1.msra.mxu0 0.0
  %602 = vmatprep.subr.mxu0 0.0
  %603 = vmatpush1.msra.mxu0 0.0
  %604 = vmatprep.subr.mxu0 0.0
  %605 = vmatpush1.msra.mxu0 0.0
  %606 = vmatprep.subr.mxu0 0.0
  %607 = vmatpush1.msra.mxu0 0.0
  %608 = vmatprep.subr.mxu0 0.0
  %609 = vmatpush1.msra.mxu0 0.0
  %610 = vmatprep.subr.mxu0 0.0
  %611 = vmatpush1.msra.mxu0 0.0
  %612 = vmatprep.subr.mxu0 0.0
  %613 = vmatpush1.msra.mxu0 0.0
  %614 = vmatprep.subr.mxu0 0.0
  %615 = vmatpush1.msra.mxu0 0.0
  %616 = vmatprep.subr.mxu0 0.0
  %617 = vmatpush1.msra.mxu0 0.0
  %618 = vmatprep.subr.mxu0 0.0
  %619 = vmatpush1.msra.mxu0 0.0
  %620 = vmatprep.subr.mxu0 0.0
  %621 = vmatpush1.msra.mxu0 0.0
  %622 = vmatprep.subr.mxu0 0.0
  %623 = vmatpush1.msra.mxu0 0.0
  %624 = vmatprep.subr.mxu0 0.0
  %625 = vmatpush1.msra.mxu0 0.0
  %626 = vmatprep.subr.mxu0 0.0
  %627 = vmatpush1.msra.mxu0 0.0
  %628 = vmatprep.subr.mxu0 0.0
  %629 = vmatpush1.msra.mxu0 0.0
  %630 = vmatprep.subr.mxu0 0.0
  %631 = vmatpush1.msra.mxu0 0.0
  %632 = vmatprep.subr.mxu0 0.0
  %633 = vmatpush1.msra.mxu0 0.0
  %634 = vmatprep.subr.mxu0 0.0
  %635 = vmatpush1.msra.mxu0 0.0
  %636 = vmatprep.subr.mxu0 0.0
  %637 = vmatpush1.msra.mxu0 0.0
  %638 = vmatprep.subr.mxu0 0.0
  %639 = vmatpush1.msra.mxu0 0.0
  %640 = vmatprep.subr.mxu0 0.0
  %641 = vmatpush1.msra.mxu0 0.0
  %642 = vmatprep.mubr.f32.mxu0 0.0
  %643 = vmatmul.mubr.f32.gmra.mrb[0].mxu0 %v33
  %v644 = vpop.f32.mrb[0].mxu0
  %v645 = vadd.f32 %v29, %v644
  %v646 = vpop.f32.mrb[0].mxu0
  %647 = vdwg.mxu0
  %s648 = scalar_lea.vmem [#allocation2], 56
  %649 = vst.msk [vmem:[%s648] sm:$0xff] %vm109, %v645
  %v650 = vld [vmem:[%s2] sm:$0xff]
  %v651 = vld [vmem:[#allocation2] sm:$0xff]
  %653 = vset.pattern.permute.xlu0 0
  %654 = vperm.xlu0 %653, %v650
  %v655 = vpop.permute.xlu0 %654
  %v657 = vmul.f32 %v655, 0.0
  %v658 = vadd.f32 %v651, %v657
  %659 = vset.pattern.permute.xlu0 1
  %660 = vperm.xlu0 %659, %v650
  %v661 = vpop.permute.xlu0 %660
  %v663 = vmul.f32 %v661, 0.0
  %v664 = vadd.f32 %v658, %v663
  %v665 = vxor.u32 %v664, 2147483648
  %v666 = vmul.f32 %v665, 1.442695
  %v667 = vpow.pop %v666
  %v668 = vadd.f32 %v667, 1.0
  %v669 = vrcp.pop %v668
  %v670 = vmul.f32 1.0, %v669
  %v671 = vtanh.pop %v664
  %v672 = vmul.f32 %v670, 0.0
  %v674 = vrot.slane %v671, 4
  %v676 = vmul.f32 %v670, %v674
  %v678 = vrot.slane %v676, 6
  %v680 = vadd.f32 %v672, %v678
  %v681 = vtanh.pop %v680
  %v683 = vrot.slane %v681, 4
  %v685 = vmul.f32 %v670, %v683
  %vm686 = vcmask 64518
  %687 = vst.msk [vmem:[#allocation3 - $0x6] sm:$0xc0] %vm686, %v685
  %v688 = vld [vmem:[%s186] sm:$0xff]
  %v689 = vlaneseq
  %v690 = vshrl.u32 %v689, 7
  %v691 = vsub.s32 6, %v690
  %v692 = vrot.slane %v685, %v691
  %v693 = vmul.f32 %v655, %v692
  %v694 = vadd.f32 %v688, %v693
  %v695 = vlaneseq
  %v696 = vshrl.u32 %v695, 7
  %v697 = vsub.s32 7, %v696
  %v698 = vrot.slane %v685, %v697
  %v699 = vmul.f32 %v661, %v698
  %v700 = vadd.f32 %v694, %v699
  %v701 = vxor.u32 %v700, 2147483648
  %v702 = vmul.f32 %v701, 1.442695
  %v703 = vpow.pop %v702
  %v704 = vadd.f32 %v703, 1.0
  %v705 = vrcp.pop %v704
  %v706 = vmul.f32 1.0, %v705
  %v707 = vtanh.pop %v700
  %v708 = vmul.f32 %v706, %v680
  %v710 = vrot.slane %v707, 4
  %v712 = vmul.f32 %v706, %v710
  %v714 = vrot.slane %v712, 6
  %v716 = vadd.f32 %v708, %v714
  %v717 = vtanh.pop %v716
  %v719 = vrot.slane %v717, 4
  %v721 = vmul.f32 %v706, %v719
  %722 = vst.msk [vmem:[#allocation3 - $0x4] sm:$0xc0] %vm686, %v721
  %v723 = vld [vmem:[%s263] sm:$0xff]
  %v724 = vlaneseq
  %v725 = vshrl.u32 %v724, 7
  %v726 = vsub.s32 6, %v725
  %v727 = vrot.slane %v721, %v726
  %v728 = vmul.f32 %v655, %v727
  %v729 = vadd.f32 %v723, %v728
  %v730 = vlaneseq
  %v731 = vshrl.u32 %v730, 7
  %v732 = vsub.s32 7, %v731
  %v733 = vrot.slane %v721, %v732
  %v734 = vmul.f32 %v661, %v733
  %v735 = vadd.f32 %v729, %v734
  %v736 = vxor.u32 %v735, 2147483648
  %v737 = vmul.f32 %v736, 1.442695
  %v738 = vpow.pop %v737
  %v739 = vadd.f32 %v738, 1.0
  %v740 = vrcp.pop %v739
  %v741 = vmul.f32 1.0, %v740
  %v742 = vtanh.pop %v735
  %v743 = vmul.f32 %v741, %v716
  %v745 = vrot.slane %v742, 4
  %v747 = vmul.f32 %v741, %v745
  %v749 = vrot.slane %v747, 6
  %v751 = vadd.f32 %v743, %v749
  %v752 = vtanh.pop %v751
  %v754 = vrot.slane %v752, 4
  %v756 = vmul.f32 %v741, %v754
  %757 = vst.msk [vmem:[#allocation3 - $0x2] sm:$0xc0] %vm686, %v756
  %v758 = vld [vmem:[%s340] sm:$0xff]
  %v759 = vlaneseq
  %v760 = vshrl.u32 %v759, 7
  %v761 = vsub.s32 6, %v760
  %v762 = vrot.slane %v756, %v761
  %v763 = vmul.f32 %v655, %v762
  %v764 = vadd.f32 %v758, %v763
  %v765 = vlaneseq
  %v766 = vshrl.u32 %v765, 7
  %v767 = vsub.s32 7, %v766
  %v768 = vrot.slane %v756, %v767
  %v769 = vmul.f32 %v661, %v768
  %v770 = vadd.f32 %v764, %v769
  %v771 = vxor.u32 %v770, 2147483648
  %v772 = vmul.f32 %v771, 1.442695
  %v773 = vpow.pop %v772
  %v774 = vadd.f32 %v773, 1.0
  %v775 = vrcp.pop %v774
  %v776 = vmul.f32 1.0, %v775
  %v777 = vtanh.pop %v770
  %v778 = vmul.f32 %v776, %v751
  %v780 = vrot.slane %v777, 4
  %v782 = vmul.f32 %v776, %v780
  %v784 = vrot.slane %v782, 6
  %v786 = vadd.f32 %v778, %v784
  %v787 = vtanh.pop %v786
  %v789 = vrot.slane %v787, 4
  %v791 = vmul.f32 %v776, %v789
  %792 = vst.msk [vmem:[#allocation3] sm:$0xc0] %vm686, %v791
  %v793 = vld [vmem:[%s417] sm:$0xff]
  %v794 = vlaneseq
  %v795 = vshrl.u32 %v794, 7
  %v796 = vsub.s32 6, %v795
  %v797 = vrot.slane %v791, %v796
  %v798 = vmul.f32 %v655, %v797
  %v799 = vadd.f32 %v793, %v798
  %v800 = vlaneseq
  %v801 = vshrl.u32 %v800, 7
  %v802 = vsub.s32 7, %v801
  %v803 = vrot.slane %v791, %v802
  %v804 = vmul.f32 %v661, %v803
  %v805 = vadd.f32 %v799, %v804
  %v806 = vxor.u32 %v805, 2147483648
  %v807 = vmul.f32 %v806, 1.442695
  %v808 = vpow.pop %v807
  %v809 = vadd.f32 %v808, 1.0
  %v810 = vrcp.pop %v809
  %v811 = vmul.f32 1.0, %v810
  %v812 = vtanh.pop %v805
  %v813 = vmul.f32 %v811, %v786
  %v815 = vrot.slane %v812, 4
  %v817 = vmul.f32 %v811, %v815
  %v819 = vrot.slane %v817, 6
  %v821 = vadd.f32 %v813, %v819
  %v822 = vtanh.pop %v821
  %v824 = vrot.slane %v822, 4
  %v826 = vmul.f32 %v811, %v824
  %827 = vst.msk [vmem:[#allocation3 + $0x2] sm:$0xc0] %vm686, %v826
  %v828 = vld [vmem:[%s494] sm:$0xff]
  %v829 = vlaneseq
  %v830 = vshrl.u32 %v829, 7
  %v831 = vsub.s32 6, %v830
  %v832 = vrot.slane %v826, %v831
  %v833 = vmul.f32 %v655, %v832
  %v834 = vadd.f32 %v828, %v833
  %v835 = vlaneseq
  %v836 = vshrl.u32 %v835, 7
  %v837 = vsub.s32 7, %v836
  %v838 = vrot.slane %v826, %v837
  %v839 = vmul.f32 %v661, %v838
  %v840 = vadd.f32 %v834, %v839
  %v841 = vxor.u32 %v840, 2147483648
  %v842 = vmul.f32 %v841, 1.442695
  %v843 = vpow.pop %v842
  %v844 = vadd.f32 %v843, 1.0
  %v845 = vrcp.pop %v844
  %v846 = vmul.f32 1.0, %v845
  %v847 = vtanh.pop %v840
  %v848 = vmul.f32 %v846, %v821
  %v850 = vrot.slane %v847, 4
  %v852 = vmul.f32 %v846, %v850
  %v854 = vrot.slane %v852, 6
  %v856 = vadd.f32 %v848, %v854
  %v857 = vtanh.pop %v856
  %v859 = vrot.slane %v857, 4
  %v861 = vmul.f32 %v846, %v859
  %862 = vst.msk [vmem:[#allocation3 + $0x4] sm:$0xc0] %vm686, %v861
  %v863 = vld [vmem:[%s571] sm:$0xff]
  %v864 = vlaneseq
  %v865 = vshrl.u32 %v864, 7
  %v866 = vsub.s32 6, %v865
  %v867 = vrot.slane %v861, %v866
  %v868 = vmul.f32 %v655, %v867
  %v869 = vadd.f32 %v863, %v868
  %v870 = vlaneseq
  %v871 = vshrl.u32 %v870, 7
  %v872 = vsub.s32 7, %v871
  %v873 = vrot.slane %v861, %v872
  %v874 = vmul.f32 %v661, %v873
  %v875 = vadd.f32 %v869, %v874
  %v876 = vxor.u32 %v875, 2147483648
  %v877 = vmul.f32 %v876, 1.442695
  %v878 = vpow.pop %v877
  %v879 = vadd.f32 %v878, 1.0
  %v880 = vrcp.pop %v879
  %v881 = vmul.f32 1.0, %v880
  %v882 = vtanh.pop %v875
  %v883 = vmul.f32 %v881, %v856
  %v885 = vrot.slane %v882, 4
  %v887 = vmul.f32 %v881, %v885
  %v889 = vrot.slane %v887, 6
  %v891 = vadd.f32 %v883, %v889
  %v892 = vtanh.pop %v891
  %v894 = vrot.slane %v892, 4
  %v896 = vmul.f32 %v881, %v894
  %897 = vst.msk [vmem:[#allocation3 + $0x6] sm:$0xc0] %vm686, %v896
  %v898 = vld [vmem:[%s648] sm:$0xff]
  %v899 = vlaneseq
  %v900 = vshrl.u32 %v899, 7
  %v901 = vsub.s32 6, %v900
  %v902 = vrot.slane %v896, %v901
  %v903 = vmul.f32 %v655, %v902
  %v904 = vadd.f32 %v898, %v903
  %v905 = vlaneseq
  %v906 = vshrl.u32 %v905, 7
  %v907 = vsub.s32 7, %v906
  %v908 = vrot.slane %v896, %v907
  %v909 = vmul.f32 %v661, %v908
  %v910 = vadd.f32 %v904, %v909
  %v911 = vxor.u32 %v910, 2147483648
  %v912 = vmul.f32 %v911, 1.442695
  %v913 = vpow.pop %v912
  %v914 = vadd.f32 %v913, 1.0
  %v915 = vrcp.pop %v914
  %v916 = vmul.f32 1.0, %v915
  %v917 = vtanh.pop %v910
  %v918 = vmul.f32 %v916, %v891
  %v920 = vrot.slane %v917, 4
  %v922 = vmul.f32 %v916, %v920
  %v924 = vrot.slane %v922, 6
  %v926 = vadd.f32 %v918, %v924
  %v927 = vtanh.pop %v926
  %v929 = vrot.slane %v927, 4
  %v931 = vmul.f32 %v916, %v929
  %932 = vst.msk [vmem:[#allocation3 + $0x8] sm:$0xc0] %vm686, %v931
  %v933 = vld [vmem:[%s4] sm:$0xff]
  %v934 = vld [vmem:[%s4 + $0x8] sm:$0xff]
  %v935 = vld [vmem:[%s4 + $0x10] sm:$0xff]
  %v936 = vld [vmem:[%s4 + $0x18] sm:$0xff]
  %v937 = vld [vmem:[#allocation3] sm:$0xff]
  %v938 = vld [vmem:[#allocation3 + $0x8] sm:$0xff]
  %v939 = vld [vmem:[%s5] sm:$0xff]
  %v940 = vld [vmem:[%s5 + $0x8] sm:$0xff]
  %v941 = vld [vmem:[%s5 + $0x10] sm:$0xff]
  %v942 = vld [vmem:[%s5 + $0x18] sm:$0xff]
  %944 = vset.pattern.permute.xlu0 0
  %945 = vperm.xlu0 %944, %v939
  %v946 = vpop.permute.xlu0 %945
  %949 = vset.pattern.permute.xlu0 0
  %950 = vperm.xlu0 %949, %v940
  %v951 = vpop.permute.xlu0 %950
  %954 = vset.pattern.permute.xlu0 0
  %955 = vperm.xlu0 %954, %v941
  %v956 = vpop.permute.xlu0 %955
  %959 = vset.pattern.permute.xlu0 0
  %960 = vperm.xlu0 %959, %v942
  %v961 = vpop.permute.xlu0 %960
  %vm963 = vcmask 130048
  %v965 = vsel %vm963, %v933, 0
  %v968 = vsel %vm963, %v934, 0
  %v971 = vsel %vm963, %v935, 0
  %v974 = vsel %vm963, %v936, 0
  %976 = vmatprep.subr.mxu0 0.0
  %977 = vmatpush1.msra.mxu0 %v937
  %978 = vmatprep.subr.mxu0 0.0
  %979 = vmatpush1.msra.mxu0 %v938
  %980 = vmatprep.subr.mxu0 0.0
  %981 = vmatpush1.msra.mxu0 0.0
  %982 = vmatprep.subr.mxu0 0.0
  %983 = vmatpush1.msra.mxu0 0.0
  %984 = vmatprep.subr.mxu0 0.0
  %985 = vmatpush1.msra.mxu0 0.0
  %986 = vmatprep.subr.mxu0 0.0
  %987 = vmatpush1.msra.mxu0 0.0
  %988 = vmatprep.subr.mxu0 0.0
  %989 = vmatpush1.msra.mxu0 0.0
  %990 = vmatprep.subr.mxu0 0.0
  %991 = vmatpush1.msra.mxu0 0.0
  %992 = vmatprep.subr.mxu0 0.0
  %993 = vmatpush1.msra.mxu0 0.0
  %994 = vmatprep.subr.mxu0 0.0
  %995 = vmatpush1.msra.mxu0 0.0
  %996 = vmatprep.subr.mxu0 0.0
  %997 = vmatpush1.msra.mxu0 0.0
  %998 = vmatprep.subr.mxu0 0.0
  %999 = vmatpush1.msra.mxu0 0.0
  %1000 = vmatprep.subr.mxu0 0.0
  %1001 = vmatpush1.msra.mxu0 0.0
  %1002 = vmatprep.subr.mxu0 0.0
  %1003 = vmatpush1.msra.mxu0 0.0
  %1004 = vmatprep.subr.mxu0 0.0
  %1005 = vmatpush1.msra.mxu0 0.0
  %1006 = vmatprep.subr.mxu0 0.0
  %1007 = vmatpush1.msra.mxu0 0.0
  %1008 = vmatprep.subr.mxu0 0.0
  %1009 = vmatpush1.msra.mxu0 0.0
  %1010 = vmatprep.subr.mxu0 0.0
  %1011 = vmatpush1.msra.mxu0 0.0
  %1012 = vmatprep.subr.mxu0 0.0
  %1013 = vmatpush1.msra.mxu0 0.0
  %1014 = vmatprep.subr.mxu0 0.0
  %1015 = vmatpush1.msra.mxu0 0.0
  %1016 = vmatprep.subr.mxu0 0.0
  %1017 = vmatpush1.msra.mxu0 0.0
  %1018 = vmatprep.subr.mxu0 0.0
  %1019 = vmatpush1.msra.mxu0 0.0
  %1020 = vmatprep.subr.mxu0 0.0
  %1021 = vmatpush1.msra.mxu0 0.0
  %1022 = vmatprep.subr.mxu0 0.0
  %1023 = vmatpush1.msra.mxu0 0.0
  %1024 = vmatprep.subr.mxu0 0.0
  %1025 = vmatpush1.msra.mxu0 0.0
  %1026 = vmatprep.subr.mxu0 0.0
  %1027 = vmatpush1.msra.mxu0 0.0
  %1028 = vmatprep.subr.mxu0 0.0
  %1029 = vmatpush1.msra.mxu0 0.0
  %1030 = vmatprep.subr.mxu0 0.0
  %1031 = vmatpush1.msra.mxu0 0.0
  %1032 = vmatprep.subr.mxu0 0.0
  %1033 = vmatpush1.msra.mxu0 0.0
  %1034 = vmatprep.subr.mxu0 0.0
  %1035 = vmatpush1.msra.mxu0 0.0
  %1036 = vmatprep.subr.mxu0 0.0
  %1037 = vmatpush1.msra.mxu0 0.0
  %1038 = vmatprep.subr.mxu0 0.0
  %1039 = vmatpush1.msra.mxu0 0.0
  %1040 = vmatprep.mubr.f32.mxu0 0.0
  %1041 = vmatmul.mubr.f32.gmra.mrb[0].mxu0 %v965
  %v1042 = vpop.f32.mrb[0].mxu0
  %v1043 = vadd.f32 %v946, %v1042
  %v1044 = vpop.f32.mrb[0].mxu0
  %1045 = vmatprep.mubr.f32.mxu0 0.0
  %1046 = vmatmul.mubr.f32.gmra.mrb[0].mxu0 %v968
  %v1047 = vpop.f32.mrb[0].mxu0
  %v1048 = vadd.f32 %v951, %v1047
  %v1049 = vpop.f32.mrb[0].mxu0
  %1050 = vmatprep.mubr.f32.mxu0 0.0
  %1051 = vmatmul.mubr.f32.gmra.mrb[0].mxu0 %v971
  %v1052 = vpop.f32.mrb[0].mxu0
  %v1053 = vadd.f32 %v956, %v1052
  %v1054 = vpop.f32.mrb[0].mxu0
  %1055 = vmatprep.mubr.f32.mxu0 0.0
  %1056 = vmatmul.mubr.f32.gmra.mrb[0].mxu0 %v974
  %v1057 = vpop.f32.mrb[0].mxu0
  %v1058 = vadd.f32 %v961, %v1057
  %v1059 = vpop.f32.mrb[0].mxu0
  %1060 = vdwg.mxu0
  %1061 = vst.msk [vmem:[%s6] sm:$0xff] %vm109, %v1043
  %1062 = vst.msk [vmem:[%s6 + $0x8] sm:$0xff] %vm109, %v1048
  %1063 = vst.msk [vmem:[%s6 + $0x10] sm:$0xff] %vm109, %v1053
  %1064 = vst.msk [vmem:[%s6 + $0x18] sm:$0xff] %vm109, %v1058
  // Predicated region
  $region26: #{tpu_custom_call.1} parent=0 // pred_check
    _
  $region27: #{tpu_custom_call.1} parent=0 // pred_check_branch
    %1066 = sbr.rel (0) target = $region29
  $region28: #{tpu_custom_call.1} parent=0 // pred_region
    _
  $region29: #{tpu_custom_call.1} parent=0 // pred_fallthru
    _
  // Predicated region
  $region30: #{tpu_custom_call.1} parent=0 // pred_check
    _
  $region31: #{tpu_custom_call.1} parent=0 // pred_check_branch
    %1068 = sbr.rel (0) target = $region33
  $region32: #{tpu_custom_call.1} parent=0 // pred_region
    _
  $region33: #{tpu_custom_call.1} parent=0 // pred_fallthru
    _

</llo_original>
